<compile_context>
chip_gen: v7x
topology: tpu7x:2x2x1
jax: 0.10.0
libtpu: 0.0.40
codegen_flags: <defaults>
</compile_context>

<pallas_src>
import jax
import jax.numpy as jnp
from jax.experimental import pallas as pl
from jax.experimental.pallas import tpu as pltpu

N_TOKENS = 11 * 11          # 121, fixed by SpectralAttention(11 * 11)
N_PAD = 128                 # lane-padded per-head token dim
LN_EPS = 1e-5               # nn.LayerNorm default
_ATTN_SCALE = float(N_TOKENS) ** -0.5       # head_dim = 121 // num_heads (num_heads == 1)
_SQRT_2_OVER_PI = 0.7978845608028654

# Set to jnp.bfloat16 on v5e (bf16-native MXU, halves weight DMA bytes); f32 accumulation is
# kept via preferred_element_type either way.  Default f32 keeps the check below exact.
MATMUL_DTYPE = jnp.float32


# ---------------------------------------------------------------------------
# in-kernel helpers
# ---------------------------------------------------------------------------
def _layernorm(x, gamma, beta):
    # x: (R, C); biased variance over last axis (PyTorch LayerNorm semantics).
    mu = jnp.mean(x, axis=-1, keepdims=True)
    xc = x - mu
    var = jnp.mean(xc * xc, axis=-1, keepdims=True)
    return xc * jax.lax.rsqrt(var + LN_EPS) * gamma + beta


def _gelu_tanh(x):
    # tanh-approx GELU: one EUP op instead of a VALU erf polynomial (|err| < ~3e-4).
    return 0.5 * x * (1.0 + jnp.tanh(_SQRT_2_OVER_PI * (x + 0.044715 * x * x * x)))


# ---------------------------------------------------------------------------
# Kernel A: spectral attention core (per batch element)
#   y = proj(softmax((q*scale) k^T) v) over channels -> (C, N)
#   (scale is pre-folded into the q columns of wqkv)
# ---------------------------------------------------------------------------
def _attn_kernel(x_ref, wqkv_ref, wproj_ref, bproj_ref, y_ref):
    xb = x_ref[0]                                               # (N, C)

    # merged q|k|v: one matmul contracting over the token axis -> (C, 3*N_PAD)
    qkv = jax.lax.dot_general(xb.astype(MATMUL_DTYPE), wqkv_ref[...],
                              (((0,), (0,)), ((), ())),
                              preferred_element_type=jnp.float32)
    q = qkv[:, 0:N_PAD]                                         # scale already folded in
    k = qkv[:, N_PAD:2 * N_PAD]
    v = qkv[:, 2 * N_PAD:3 * N_PAD]

    # channel-channel attention (C, C); zero-padded token columns contribute nothing -> exact
    att = jax.lax.dot_general(q.astype(MATMUL_DTYPE), k.astype(MATMUL_DTYPE),
                              (((1,), (1,)), ((), ())),
                              preferred_element_type=jnp.float32)
    att = att - jnp.max(att, axis=-1, keepdims=True)
    e = jnp.exp(att)
    att = e * pl.reciprocal(jnp.sum(e, axis=-1, keepdims=True), approx=True)

    y = jnp.dot(att.astype(MATMUL_DTYPE), v.astype(MATMUL_DTYPE),
                preferred_element_type=jnp.float32)             # (C, N_PAD)
    y = jnp.dot(y.astype(MATMUL_DTYPE), wproj_ref[...],
                preferred_element_type=jnp.float32) + bproj_ref[...]   # (C, N)
    y_ref[0] = y


# ---------------------------------------------------------------------------
# Kernel B: norm1 residual + MLP (per batch element)
#   cur = LayerNorm1(x)           (recomputed here: avoids an HBM round-trip of `cur`)
#   x1  = y_reshaped + cur
#   out = x1 + fc2(gelu(fc1(LayerNorm2(x1))))
# ---------------------------------------------------------------------------
def _mlp_kernel(yr_ref, x_ref, g1_ref, beta1_ref, g2_ref, beta2_ref,
                w1_ref, bb1_ref, w2_ref, bb2_ref, o_ref):
    cur = _layernorm(x_ref[0], g1_ref[...], beta1_ref[...])     # (N, C)
    x1 = yr_ref[0] + cur                                        # (N, C)
    h = _layernorm(x1, g2_ref[...], beta2_ref[...])
    h = jnp.dot(h.astype(MATMUL_DTYPE), w1_ref[...],
                preferred_element_type=jnp.float32) + bb1_ref[...]
    h = _gelu_tanh(h)
    h = jnp.dot(h.astype(MATMUL_DTYPE), w2_ref[...],
                preferred_element_type=jnp.float32) + bb2_ref[...]
    o_ref[0] = x1 + h


# ---------------------------------------------------------------------------
# wrapper
# ---------------------------------------------------------------------------
def _forward_impl(x, params):
    B, N, C = x.shape
    H = params["w1_t"].shape[1]

    def _full(shape):
        return pl.BlockSpec(shape, lambda b, _s=len(shape): (0,) * _s)

    y = pl.pallas_call(
        _attn_kernel,
        out_shape=jax.ShapeDtypeStruct((B, C, N), jnp.float32),
        grid=(B,),
        in_specs=[
            pl.BlockSpec((1, N, C), lambda b: (b, 0, 0)),
            _full((N, 3 * N_PAD)),     # wqkv_pad  (q|k|v cols each padded to 128, scale in q)
            _full((N_PAD, N)),         # wproj_pad (rows padded to 128)
            _full((1, N)),             # bproj
        ],
        out_specs=pl.BlockSpec((1, C, N), lambda b: (b, 0, 0)),
        compiler_params=pltpu.CompilerParams(dimension_semantics=("parallel",)),
    )(x, params["wqkv_pad"], params["wproj_pad"], params["bproj"])

    # PyTorch: x.transpose(1, 2).reshape(B, N, C) with the singleton head dim is a raw memory
    # reinterpretation -> a free row-major bitcast in XLA (no compute kernel). Valid only for
    # num_heads == 1 (which the reference module requires anyway).
    y_r = y.reshape(B, N, C)

    out = pl.pallas_call(
        _mlp_kernel,
        out_shape=jax.ShapeDtypeStruct((B, N, C), jnp.float32),
        grid=(B,),
        in_specs=[
            pl.BlockSpec((1, N, C), lambda b: (b, 0, 0)),   # y reshaped
            pl.BlockSpec((1, N, C), lambda b: (b, 0, 0)),   # original x (for LN1 recompute)
            _full((1, C)),             # gamma1
            _full((1, C)),             # beta1
            _full((1, C)),             # gamma2
            _full((1, C)),             # beta2
            _full((C, H)),             # w1_t
            _full((1, H)),             # bb1
            _full((H, C)),             # w2_t
            _full((1, C)),             # bb2
        ],
        out_specs=pl.BlockSpec((1, N, C), lambda b: (b, 0, 0)),
        compiler_params=pltpu.CompilerParams(dimension_semantics=("parallel",)),
    )(y_r, x, params["g1"], params["beta1"], params["g2"], params["beta2"],
      params["w1_t"], params["bb1"], params["w2_t"], params["bb2"])
    return out


_forward = jax.jit(_forward_impl)


def spectral_block_forward(x, size, params):
    return _forward(x, params), size


# ---------------------------------------------------------------------------
# pure-JAX reference (unpadded f32 weights, exact GELU, explicit q scale)
# ---------------------------------------------------------------------------
def reference_forward(x, params):
    B, N, C = x.shape
    hp = jax.lax.Precision.HIGHEST

    def ln(v, g, b):
        mu = v.mean(-1, keepdims=True)
        var = ((v - mu) ** 2).mean(-1, keepdims=True)
        return (v - mu) / jnp.sqrt(var + LN_EPS) * g + b

    cur = ln(x, params["g1"], params["beta1"])
    xt = jnp.swapaxes(x, -1, -2)                                # (B, C, N)
    q = jnp.einsum("bcn,nm->bcm", xt, params["wq_t"], precision=hp) * (N ** -0.5)
    k = jnp.einsum("bcn,nm->bcm", xt, params["wk_t"], precision=hp)
    v = jnp.einsum("bcn,nm->bcm", xt, params["wv_t"], precision=hp)
    att = jax.nn.softmax(jnp.einsum("bcn,bdn->bcd", q, k, precision=hp), axis=-1)
    y = jnp.einsum("bcd,bdn->bcn", att, v, precision=hp)
    y = jnp.einsum("bcn,nm->bcm", y, params["wproj_t"], precision=hp) + params["bproj"]
    x1 = y.reshape(B, N, C) + cur
    h = ln(x1, params["g2"], params["beta2"])
    h = jnp.einsum("bnc,ch->bnh", h, params["w1_t"], precision=hp) + params["bb1"]
    h = jax.nn.gelu(h, approximate=False)
    h = jnp.einsum("bnh,hc->bnc", h, params["w2_t"], precision=hp) + params["bb2"]
    return x1 + h


# ---------------------------------------------------------------------------
if __name__ == "__main__":
    B = 2
    dim = 32                      # SpectralBlock dim (channel count C)
    num_heads = 1                 # required for proj=Linear(121,121) to be applicable
    mlp_ratio = 4.0
    N = N_TOKENS                  # 121 tokens (hardcoded 11*11 in the module)
    hidden = int(dim * mlp_ratio) # 128

    key = jax.random.PRNGKey(0)
    ks = jax.random.split(key, 9)

    # nn.Linear(121, 3*121, bias=False) -> weight (363, 121)
    w_qkv = jax.random.normal(ks[0], (3 * N, N), jnp.float32) * 0.05
    # nn.Linear(121, 121) with bias
    w_proj = jax.random.normal(ks[1], (N, N), jnp.float32) * 0.05
    b_proj = jax.random.normal(ks[2], (N,), jnp.float32) * 0.05
    # Mlp: fc1 (hidden, dim) + bias, fc2 (dim, hidden) + bias
    w_fc1 = jax.random.normal(ks[3], (hidden, dim), jnp.float32) * 0.05
    b_fc1 = jax.random.normal(ks[4], (hidden,), jnp.float32) * 0.05
    w_fc2 = jax.random.normal(ks[5], (dim, hidden), jnp.float32) * 0.05
    b_fc2 = jax.random.normal(ks[6], (dim,), jnp.float32) * 0.05
    # LayerNorm affine params (perturbed from the default ones/zeros init)
    g1 = 1.0 + 0.1 * jax.random.normal(ks[7], (dim,), jnp.float32)
    g2 = 1.0 + 0.1 * jax.random.normal(ks[8], (dim,), jnp.float32)

    wq_t = w_qkv[0:N].T                 # (N, N)
    wk_t = w_qkv[N:2 * N].T
    wv_t = w_qkv[2 * N:3 * N].T
    wproj_t = w_proj.T

    def _pad_cols(w):                   # (N, N) -> (N, N_PAD) with zero columns
        return jnp.pad(w, ((0, 0), (0, N_PAD - w.shape[1])))

    ln_common = dict(
        g1=g1.reshape(1, dim),
        beta1=jnp.zeros((1, dim), jnp.float32),
        g2=g2.reshape(1, dim),
        beta2=jnp.zeros((1, dim), jnp.float32),
        bb1=b_fc1.reshape(1, hidden),
        bb2=b_fc2.reshape(1, dim),
    )

    # q scale folded into the q columns of the merged qkv weight (numerically identical).
    wqkv_pad = jnp.concatenate(
        [_pad_cols(wq_t * _ATTN_SCALE), _pad_cols(wk_t), _pad_cols(wv_t)], axis=1)
    wproj_pad = jnp.pad(wproj_t, ((0, N_PAD - N), (0, 0)))       # (N_PAD, N), zero pad rows

    kernel_params = dict(
        wqkv_pad=wqkv_pad.astype(MATMUL_DTYPE),                  # (N, 3*N_PAD)
        wproj_pad=wproj_pad.astype(MATMUL_DTYPE),
        bproj=b_proj.reshape(1, N),
        w1_t=w_fc1.T.astype(MATMUL_DTYPE),                       # (dim, hidden)
        w2_t=w_fc2.T.astype(MATMUL_DTYPE),                       # (hidden, dim)
        **ln_common,
    )
    ref_params = dict(wq_t=wq_t, wk_t=wk_t, wv_t=wv_t, wproj_t=wproj_t,
                      bproj=b_proj.reshape(1, N), w1_t=w_fc1.T, w2_t=w_fc2.T,
                      **ln_common)

    x = jax.random.normal(jax.random.PRNGKey(42), (B, N, dim), jnp.float32)
    size = (11, 11)

    out, out_size = spectral_block_forward(x, size, kernel_params)
    out = jax.block_until_ready(out)

    ref = reference_forward(x, ref_params)
    max_err = float(jnp.max(jnp.abs(out - ref)))
    assert out.shape == (B, N, dim), out.shape
    assert out_size == size
    assert max_err < 1e-2, f"max abs error vs reference: {max_err}"
    print("KERNEL_OK")
</pallas_src>

<mosaic_0001>
module attributes {stable_mosaic.version = 11 : i64} {
  func.func @_attn_kernel(%arg0: i32, %arg1: memref<1x121x32xf32, #tpu.memory_space<vmem>>, %arg2: memref<121x384xf32, #tpu.memory_space<vmem>>, %arg3: memref<128x121xf32, #tpu.memory_space<vmem>>, %arg4: memref<1x121xf32, #tpu.memory_space<vmem>>, %arg5: memref<1x32x121xf32, #tpu.memory_space<vmem>>) attributes {dimension_semantics = [#tpu.dimension_semantics<parallel>], iteration_bounds = array<i64: 2>, scalar_prefetch = 0 : i64, scratch_operands = 0 : i64, tpu.core_type = #tpu.core_type<tc>, window_params = [{transform_indices = @transform_0, window_bounds = array<i64: 1, 121, 32>}, {pipeline_mode = #tpu.pipeline_mode<synchronous>, transform_indices = @transform_1, window_bounds = array<i64: 121, 384>}, {pipeline_mode = #tpu.pipeline_mode<synchronous>, transform_indices = @transform_2, window_bounds = array<i64: 128, 121>}, {pipeline_mode = #tpu.pipeline_mode<synchronous>, transform_indices = @transform_3, window_bounds = array<i64: 1, 121>}, {transform_indices = @transform_4, window_bounds = array<i64: 1, 32, 121>}]} {
    %c0 = arith.constant 0 : index
    %c0_0 = arith.constant 0 : index
    %c0_1 = arith.constant 0 : index
    %0 = vector.load %arg1[%c0, %c0_0, %c0_1] : memref<1x121x32xf32, #tpu.memory_space<vmem>>, vector<1x121x32xf32>
    %1 = vector.shape_cast %0 : vector<1x121x32xf32> to vector<121x32xf32>
    %c0_2 = arith.constant 0 : index
    %c0_3 = arith.constant 0 : index
    %2 = vector.load %arg2[%c0_2, %c0_3] : memref<121x384xf32, #tpu.memory_space<vmem>>, vector<121x384xf32>
    %cst = arith.constant dense<0.000000e+00> : vector<32x384xf32>
    %3 = tpu.matmul %1, %2, %cst {dimension_numbers = #tpu.dot_dimension_numbers<[0], [0], [1], [1], [0, 1, 1, 1], [], []>} : vector<121x32xf32>, vector<121x384xf32>, vector<32x384xf32> -> vector<32x384xf32>
    %4 = vector.extract_strided_slice %3 {offsets = [0, 0], sizes = [32, 128], strides = [1, 1]} : vector<32x384xf32> to vector<32x128xf32>
    %5 = vector.extract_strided_slice %3 {offsets = [0, 128], sizes = [32, 128], strides = [1, 1]} : vector<32x384xf32> to vector<32x128xf32>
    %6 = vector.extract_strided_slice %3 {offsets = [0, 256], sizes = [32, 128], strides = [1, 1]} : vector<32x384xf32> to vector<32x128xf32>
    %cst_4 = arith.constant dense<0.000000e+00> : vector<32x32xf32>
    %7 = tpu.matmul %4, %5, %cst_4 {dimension_numbers = #tpu.dot_dimension_numbers<[1], [1], [0], [0], [0, 0, 1, 0], [], []>} : vector<32x128xf32>, vector<32x128xf32>, vector<32x32xf32> -> vector<32x32xf32>
    %cst_5 = arith.constant dense<0xFF800000> : vector<32xf32>
    %8 = vector.multi_reduction <maximumf>, %7, %cst_5 [1] : vector<32x32xf32> to vector<32xf32>
    %9 = vector.shape_cast %8 : vector<32xf32> to vector<32x1xf32>
    %10 = vector.broadcast %9 : vector<32x1xf32> to vector<32x32xf32>
    %11 = arith.subf %7, %10 : vector<32x32xf32>
    %12 = math.exp %11 : vector<32x32xf32>
    %cst_6 = arith.constant dense<0.000000e+00> : vector<32xf32>
    %13 = vector.multi_reduction <add>, %12, %cst_6 [1] : vector<32x32xf32> to vector<32xf32>
    %14 = vector.shape_cast %13 : vector<32xf32> to vector<32x1xf32>
    %15 = tpu.reciprocal %14 {approx = true} : vector<32x1xf32> -> vector<32x1xf32>
    %16 = vector.broadcast %15 : vector<32x1xf32> to vector<32x32xf32>
    %17 = arith.mulf %12, %16 : vector<32x32xf32>
    %cst_7 = arith.constant dense<0.000000e+00> : vector<32x128xf32>
    %18 = tpu.matmul %17, %6, %cst_7 {dimension_numbers = #tpu.dot_dimension_numbers<[1], [0], [0], [1], [0, 0, 1, 1], [], []>} : vector<32x32xf32>, vector<32x128xf32>, vector<32x128xf32> -> vector<32x128xf32>
    %c0_8 = arith.constant 0 : index
    %c0_9 = arith.constant 0 : index
    %19 = vector.load %arg3[%c0_8, %c0_9] : memref<128x121xf32, #tpu.memory_space<vmem>>, vector<128x121xf32>
    %cst_10 = arith.constant dense<0.000000e+00> : vector<32x121xf32>
    %20 = tpu.matmul %18, %19, %cst_10 {dimension_numbers = #tpu.dot_dimension_numbers<[1], [0], [0], [1], [0, 0, 1, 1], [], []>} : vector<32x128xf32>, vector<128x121xf32>, vector<32x121xf32> -> vector<32x121xf32>
    %c0_11 = arith.constant 0 : index
    %c0_12 = arith.constant 0 : index
    %21 = vector.load %arg4[%c0_11, %c0_12] : memref<1x121xf32, #tpu.memory_space<vmem>>, vector<1x121xf32>
    %22 = vector.broadcast %21 : vector<1x121xf32> to vector<32x121xf32>
    %23 = arith.addf %20, %22 : vector<32x121xf32>
    %c0_13 = arith.constant 0 : index
    %c0_14 = arith.constant 0 : index
    %c0_15 = arith.constant 0 : index
    %24 = vector.load %arg5[%c0_13, %c0_14, %c0_15] : memref<1x32x121xf32, #tpu.memory_space<vmem>>, vector<1x32x121xf32>
    %25 = vector.shape_cast %24 : vector<1x32x121xf32> to vector<32x121xf32>
    %26 = vector.shape_cast %23 : vector<32x121xf32> to vector<1x32x121xf32>
    tpu.vector_store %arg5[%c0_13, %c0_14, %c0_15], %26 {strides = array<i32>} : memref<1x32x121xf32, #tpu.memory_space<vmem>>, vector<1x32x121xf32>,
    return
  }
  func.func @transform_0(%arg0: i32) -> (i32, i32, i32) {
    %c0_i32 = arith.constant 0 : i32
    %c0_i32_0 = arith.constant 0 : i32
    %c0_i32_1 = arith.constant 0 : i32
    return %arg0, %c0_i32, %c0_i32_0 : i32, i32, i32
  }
  func.func @transform_1(%arg0: i32) -> (i32, i32) {
    %c0_i32 = arith.constant 0 : i32
    %c0_i32_0 = arith.constant 0 : i32
    %c0_i32_1 = arith.constant 0 : i32
    return %c0_i32, %c0_i32_0 : i32, i32
  }
  func.func @transform_2(%arg0: i32) -> (i32, i32) {
    %c0_i32 = arith.constant 0 : i32
    %c0_i32_0 = arith.constant 0 : i32
    %c0_i32_1 = arith.constant 0 : i32
    return %c0_i32, %c0_i32_0 : i32, i32
  }
  func.func @transform_3(%arg0: i32) -> (i32, i32) {
    %c0_i32 = arith.constant 0 : i32
    %c0_i32_0 = arith.constant 0 : i32
    %c0_i32_1 = arith.constant 0 : i32
    return %c0_i32, %c0_i32_0 : i32, i32
  }
  func.func @transform_4(%arg0: i32) -> (i32, i32, i32) {
    %c0_i32 = arith.constant 0 : i32
    %c0_i32_0 = arith.constant 0 : i32
    %c0_i32_1 = arith.constant 0 : i32
    return %arg0, %c0_i32, %c0_i32_0 : i32, i32, i32
  }
}

module attributes {stable_mosaic.version = 11 : i64} {
  func.func @_mlp_kernel(%arg0: i32, %arg1: memref<1x121x32xf32, #tpu.memory_space<vmem>>, %arg2: memref<1x121x32xf32, #tpu.memory_space<vmem>>, %arg3: memref<1x32xf32, #tpu.memory_space<vmem>>, %arg4: memref<1x32xf32, #tpu.memory_space<vmem>>, %arg5: memref<1x32xf32, #tpu.memory_space<vmem>>, %arg6: memref<1x32xf32, #tpu.memory_space<vmem>>, %arg7: memref<32x128xf32, #tpu.memory_space<vmem>>, %arg8: memref<1x128xf32, #tpu.memory_space<vmem>>, %arg9: memref<128x32xf32, #tpu.memory_space<vmem>>, %arg10: memref<1x32xf32, #tpu.memory_space<vmem>>, %arg11: memref<1x121x32xf32, #tpu.memory_space<vmem>>) attributes {dimension_semantics = [#tpu.dimension_semantics<parallel>], iteration_bounds = array<i64: 2>, scalar_prefetch = 0 : i64, scratch_operands = 0 : i64, tpu.core_type = #tpu.core_type<tc>, window_params = [{transform_indices = @transform_0, window_bounds = array<i64: 1, 121, 32>}, {transform_indices = @transform_1, window_bounds = array<i64: 1, 121, 32>}, {pipeline_mode = #tpu.pipeline_mode<synchronous>, transform_indices = @transform_2, window_bounds = array<i64: 1, 32>}, {pipeline_mode = #tpu.pipeline_mode<synchronous>, transform_indices = @transform_3, window_bounds = array<i64: 1, 32>}, {pipeline_mode = #tpu.pipeline_mode<synchronous>, transform_indices = @transform_4, window_bounds = array<i64: 1, 32>}, {pipeline_mode = #tpu.pipeline_mode<synchronous>, transform_indices = @transform_5, window_bounds = array<i64: 1, 32>}, {pipeline_mode = #tpu.pipeline_mode<synchronous>, transform_indices = @transform_6, window_bounds = array<i64: 32, 128>}, {pipeline_mode = #tpu.pipeline_mode<synchronous>, transform_indices = @transform_7, window_bounds = array<i64: 1, 128>}, {pipeline_mode = #tpu.pipeline_mode<synchronous>, transform_indices = @transform_8, window_bounds = array<i64: 128, 32>}, {pipeline_mode = #tpu.pipeline_mode<synchronous>, transform_indices = @transform_9, window_bounds = array<i64: 1, 32>}, {transform_indices = @transform_10, window_bounds = array<i64: 1, 121, 32>}]} {
    %c0 = arith.constant 0 : index
    %c0_0 = arith.constant 0 : index
    %c0_1 = arith.constant 0 : index
    %0 = vector.load %arg2[%c0, %c0_0, %c0_1] : memref<1x121x32xf32, #tpu.memory_space<vmem>>, vector<1x121x32xf32>
    %1 = vector.shape_cast %0 : vector<1x121x32xf32> to vector<121x32xf32>
    %c0_2 = arith.constant 0 : index
    %c0_3 = arith.constant 0 : index
    %2 = vector.load %arg3[%c0_2, %c0_3] : memref<1x32xf32, #tpu.memory_space<vmem>>, vector<1x32xf32>
    %c0_4 = arith.constant 0 : index
    %c0_5 = arith.constant 0 : index
    %3 = vector.load %arg4[%c0_4, %c0_5] : memref<1x32xf32, #tpu.memory_space<vmem>>, vector<1x32xf32>
    %cst = arith.constant dense<0.000000e+00> : vector<121xf32>
    %4 = vector.multi_reduction <add>, %1, %cst [1] : vector<121x32xf32> to vector<121xf32>
    %5 = vector.shape_cast %4 : vector<121xf32> to vector<121x1xf32>
    %cst_6 = arith.constant 3.200000e+01 : f32
    %6 = vector.broadcast %cst_6 : f32 to vector<121x1xf32>
    %7 = arith.divf %5, %6 : vector<121x1xf32>
    %8 = vector.broadcast %7 : vector<121x1xf32> to vector<121x32xf32>
    %9 = arith.subf %1, %8 : vector<121x32xf32>
    %10 = arith.mulf %9, %9 : vector<121x32xf32>
    %cst_7 = arith.constant dense<0.000000e+00> : vector<121xf32>
    %11 = vector.multi_reduction <add>, %10, %cst_7 [1] : vector<121x32xf32> to vector<121xf32>
    %12 = vector.shape_cast %11 : vector<121xf32> to vector<121x1xf32>
    %cst_8 = arith.constant 3.200000e+01 : f32
    %13 = vector.broadcast %cst_8 : f32 to vector<121x1xf32>
    %14 = arith.divf %12, %13 : vector<121x1xf32>
    %cst_9 = arith.constant 9.99999974E-6 : f32
    %15 = vector.broadcast %cst_9 : f32 to vector<121x1xf32>
    %16 = arith.addf %14, %15 : vector<121x1xf32>
    %17 = math.rsqrt %16 : vector<121x1xf32>
    %18 = vector.broadcast %17 : vector<121x1xf32> to vector<121x32xf32>
    %19 = arith.mulf %9, %18 : vector<121x32xf32>
    %20 = vector.broadcast %2 : vector<1x32xf32> to vector<121x32xf32>
    %21 = arith.mulf %19, %20 : vector<121x32xf32>
    %22 = vector.broadcast %3 : vector<1x32xf32> to vector<121x32xf32>
    %23 = arith.addf %21, %22 : vector<121x32xf32>
    %c0_10 = arith.constant 0 : index
    %c0_11 = arith.constant 0 : index
    %c0_12 = arith.constant 0 : index
    %24 = vector.load %arg1[%c0_10, %c0_11, %c0_12] : memref<1x121x32xf32, #tpu.memory_space<vmem>>, vector<1x121x32xf32>
    %25 = vector.shape_cast %24 : vector<1x121x32xf32> to vector<121x32xf32>
    %26 = arith.addf %25, %23 : vector<121x32xf32>
    %c0_13 = arith.constant 0 : index
    %c0_14 = arith.constant 0 : index
    %27 = vector.load %arg5[%c0_13, %c0_14] : memref<1x32xf32, #tpu.memory_space<vmem>>, vector<1x32xf32>
    %c0_15 = arith.constant 0 : index
    %c0_16 = arith.constant 0 : index
    %28 = vector.load %arg6[%c0_15, %c0_16] : memref<1x32xf32, #tpu.memory_space<vmem>>, vector<1x32xf32>
    %cst_17 = arith.constant dense<0.000000e+00> : vector<121xf32>
    %29 = vector.multi_reduction <add>, %26, %cst_17 [1] : vector<121x32xf32> to vector<121xf32>
    %30 = vector.shape_cast %29 : vector<121xf32> to vector<121x1xf32>
    %cst_18 = arith.constant 3.200000e+01 : f32
    %31 = vector.broadcast %cst_18 : f32 to vector<121x1xf32>
    %32 = arith.divf %30, %31 : vector<121x1xf32>
    %33 = vector.broadcast %32 : vector<121x1xf32> to vector<121x32xf32>
    %34 = arith.subf %26, %33 : vector<121x32xf32>
    %35 = arith.mulf %34, %34 : vector<121x32xf32>
    %cst_19 = arith.constant dense<0.000000e+00> : vector<121xf32>
    %36 = vector.multi_reduction <add>, %35, %cst_19 [1] : vector<121x32xf32> to vector<121xf32>
    %37 = vector.shape_cast %36 : vector<121xf32> to vector<121x1xf32>
    %cst_20 = arith.constant 3.200000e+01 : f32
    %38 = vector.broadcast %cst_20 : f32 to vector<121x1xf32>
    %39 = arith.divf %37, %38 : vector<121x1xf32>
    %cst_21 = arith.constant 9.99999974E-6 : f32
    %40 = vector.broadcast %cst_21 : f32 to vector<121x1xf32>
    %41 = arith.addf %39, %40 : vector<121x1xf32>
    %42 = math.rsqrt %41 : vector<121x1xf32>
    %43 = vector.broadcast %42 : vector<121x1xf32> to vector<121x32xf32>
    %44 = arith.mulf %34, %43 : vector<121x32xf32>
    %45 = vector.broadcast %27 : vector<1x32xf32> to vector<121x32xf32>
    %46 = arith.mulf %44, %45 : vector<121x32xf32>
    %47 = vector.broadcast %28 : vector<1x32xf32> to vector<121x32xf32>
    %48 = arith.addf %46, %47 : vector<121x32xf32>
    %c0_22 = arith.constant 0 : index
    %c0_23 = arith.constant 0 : index
    %49 = vector.load %arg7[%c0_22, %c0_23] : memref<32x128xf32, #tpu.memory_space<vmem>>, vector<32x128xf32>
    %cst_24 = arith.constant dense<0.000000e+00> : vector<121x128xf32>
    %50 = tpu.matmul %48, %49, %cst_24 {dimension_numbers = #tpu.dot_dimension_numbers<[1], [0], [0], [1], [0, 0, 1, 1], [], []>} : vector<121x32xf32>, vector<32x128xf32>, vector<121x128xf32> -> vector<121x128xf32>
    %c0_25 = arith.constant 0 : index
    %c0_26 = arith.constant 0 : index
    %51 = vector.load %arg8[%c0_25, %c0_26] : memref<1x128xf32, #tpu.memory_space<vmem>>, vector<1x128xf32>
    %52 = vector.broadcast %51 : vector<1x128xf32> to vector<121x128xf32>
    %53 = arith.addf %50, %52 : vector<121x128xf32>
    %cst_27 = arith.constant 5.000000e-01 : f32
    %54 = vector.broadcast %cst_27 : f32 to vector<121x128xf32>
    %55 = arith.mulf %54, %53 : vector<121x128xf32>
    %cst_28 = arith.constant 4.471500e-02 : f32
    %56 = vector.broadcast %cst_28 : f32 to vector<121x128xf32>
    %57 = arith.mulf %56, %53 : vector<121x128xf32>
    %58 = arith.mulf %57, %53 : vector<121x128xf32>
    %59 = arith.mulf %58, %53 : vector<121x128xf32>
    %60 = arith.addf %53, %59 : vector<121x128xf32>
    %cst_29 = arith.constant 0.797884583 : f32
    %61 = vector.broadcast %cst_29 : f32 to vector<121x128xf32>
    %62 = arith.mulf %61, %60 : vector<121x128xf32>
    %63 = math.tanh %62 : vector<121x128xf32>
    %cst_30 = arith.constant 1.000000e+00 : f32
    %64 = vector.broadcast %cst_30 : f32 to vector<121x128xf32>
    %65 = arith.addf %64, %63 : vector<121x128xf32>
    %66 = arith.mulf %55, %65 : vector<121x128xf32>
    %c0_31 = arith.constant 0 : index
    %c0_32 = arith.constant 0 : index
    %67 = vector.load %arg9[%c0_31, %c0_32] : memref<128x32xf32, #tpu.memory_space<vmem>>, vector<128x32xf32>
    %cst_33 = arith.constant dense<0.000000e+00> : vector<121x32xf32>
    %68 = tpu.matmul %66, %67, %cst_33 {dimension_numbers = #tpu.dot_dimension_numbers<[1], [0], [0], [1], [0, 0, 1, 1], [], []>} : vector<121x128xf32>, vector<128x32xf32>, vector<121x32xf32> -> vector<121x32xf32>
    %c0_34 = arith.constant 0 : index
    %c0_35 = arith.constant 0 : index
    %69 = vector.load %arg10[%c0_34, %c0_35] : memref<1x32xf32, #tpu.memory_space<vmem>>, vector<1x32xf32>
    %70 = vector.broadcast %69 : vector<1x32xf32> to vector<121x32xf32>
    %71 = arith.addf %68, %70 : vector<121x32xf32>
    %72 = arith.addf %26, %71 : vector<121x32xf32>
    %c0_36 = arith.constant 0 : index
    %c0_37 = arith.constant 0 : index
    %c0_38 = arith.constant 0 : index
    %73 = vector.load %arg11[%c0_36, %c0_37, %c0_38] : memref<1x121x32xf32, #tpu.memory_space<vmem>>, vector<1x121x32xf32>
    %74 = vector.shape_cast %73 : vector<1x121x32xf32> to vector<121x32xf32>
    %75 = vector.shape_cast %72 : vector<121x32xf32> to vector<1x121x32xf32>
    tpu.vector_store %arg11[%c0_36, %c0_37, %c0_38], %75 {strides = array<i32>} : memref<1x121x32xf32, #tpu.memory_space<vmem>>, vector<1x121x32xf32>,
    return
  }
  func.func @transform_0(%arg0: i32) -> (i32, i32, i32) {
    %c0_i32 = arith.constant 0 : i32
    %c0_i32_0 = arith.constant 0 : i32
    %c0_i32_1 = arith.constant 0 : i32
    return %arg0, %c0_i32, %c0_i32_0 : i32, i32, i32
  }
  func.func @transform_1(%arg0: i32) -> (i32, i32, i32) {
    %c0_i32 = arith.constant 0 : i32
    %c0_i32_0 = arith.constant 0 : i32
    %c0_i32_1 = arith.constant 0 : i32
    return %arg0, %c0_i32, %c0_i32_0 : i32, i32, i32
  }
  func.func @transform_2(%arg0: i32) -> (i32, i32) {
    %c0_i32 = arith.constant 0 : i32
    %c0_i32_0 = arith.constant 0 : i32
    %c0_i32_1 = arith.constant 0 : i32
    return %c0_i32, %c0_i32_0 : i32, i32
  }
  func.func @transform_3(%arg0: i32) -> (i32, i32) {
    %c0_i32 = arith.constant 0 : i32
    %c0_i32_0 = arith.constant 0 : i32
    %c0_i32_1 = arith.constant 0 : i32
    return %c0_i32, %c0_i32_0 : i32, i32
  }
  func.func @transform_4(%arg0: i32) -> (i32, i32) {
    %c0_i32 = arith.constant 0 : i32
    %c0_i32_0 = arith.constant 0 : i32
    %c0_i32_1 = arith.constant 0 : i32
    return %c0_i32, %c0_i32_0 : i32, i32
  }
  func.func @transform_5(%arg0: i32) -> (i32, i32) {
    %c0_i32 = arith.constant 0 : i32
    %c0_i32_0 = arith.constant 0 : i32
    %c0_i32_1 = arith.constant 0 : i32
    return %c0_i32, %c0_i32_0 : i32, i32
  }
  func.func @transform_6(%arg0: i32) -> (i32, i32) {
    %c0_i32 = arith.constant 0 : i32
    %c0_i32_0 = arith.constant 0 : i32
    %c0_i32_1 = arith.constant 0 : i32
    return %c0_i32, %c0_i32_0 : i32, i32
  }
  func.func @transform_7(%arg0: i32) -> (i32, i32) {
    %c0_i32 = arith.constant 0 : i32
    %c0_i32_0 = arith.constant 0 : i32
    %c0_i32_1 = arith.constant 0 : i32
    return %c0_i32, %c0_i32_0 : i32, i32
  }
  func.func @transform_8(%arg0: i32) -> (i32, i32) {
    %c0_i32 = arith.constant 0 : i32
    %c0_i32_0 = arith.constant 0 : i32
    %c0_i32_1 = arith.constant 0 : i32
    return %c0_i32, %c0_i32_0 : i32, i32
  }
  func.func @transform_9(%arg0: i32) -> (i32, i32) {
    %c0_i32 = arith.constant 0 : i32
    %c0_i32_0 = arith.constant 0 : i32
    %c0_i32_1 = arith.constant 0 : i32
    return %c0_i32, %c0_i32_0 : i32, i32
  }
  func.func @transform_10(%arg0: i32) -> (i32, i32, i32) {
    %c0_i32 = arith.constant 0 : i32
    %c0_i32_0 = arith.constant 0 : i32
    %c0_i32_1 = arith.constant 0 : i32
    return %arg0, %c0_i32, %c0_i32_0 : i32, i32, i32
  }
}

</mosaic_0001>

<llo_original>
// kernel: _forward_impl.2
$region0: #{_forward_impl.2}
  #allocation0 [shape = 'u32[]', space=smem, size = 0x4, offset = 0x4, fixed_abs, tag = 'smem constant byte address 0x4 - core index']
  #allocation1 [shape = 'u32[144,128]{1,0:T(1,128)}', space=vmem, size = 0x12000, scoped, tag = 'internal scratch']
  %s0 = inlined_call_operand.vmem [shape: f32[2,121,32], index: 0, kind: input, shape index: {}]
  %s1 = inlined_call_operand.vmem [shape: f32[121,384], index: 1, kind: input, shape index: {}]
  %s2 = inlined_call_operand.vmem [shape: f32[128,121], index: 2, kind: input, shape index: {}]
  %s3 = inlined_call_operand.vmem [shape: f32[1,121], index: 3, kind: input, shape index: {}]
  %s4 = inlined_call_operand.vmem [shape: f32[2,32,121], index: 4, kind: output, shape index: {}]
  %s5 = sld [smem:[#allocation0]]
  $region49: #{_forward_impl.2} parent=0
    _
  %s7 = ssub.s32 1, %s5
  %s8 = scalar_select 0, %s7, %s5
  loop: start=0, step=1, limit=4
  $region2: #{_forward_impl.2} parent=0 // loop_pre_header
    _
  $region3: #{_forward_impl.2} parent=0 // loop_header
    %s10 = sphi 0, %s14
    %p11 = scmp.ge.s32.totalorder %s10, 4
    %s20 = sphi 0, %s22
    %s23 = sphi 0, %s20
    %s24 = sphi 0, %s23
    %s40 = sphi 0, %s24
    %s44 = sphi 0, %s44
    %s46 = sphi 0, %s44
    %s47 = sphi 0, %s46
    %s61 = sphi 0, %s47
    %s65 = sphi 0, %s65
    %s67 = sphi 0, %s65
    %s68 = sphi 0, %s67
    %s82 = sphi 0, %s68
    %s86 = sphi 0, %s86
    %s88 = sphi 0, %s86
    %s89 = sphi 0, %s88
    %s103 = sphi 0, %s89
    %s109 = sphi 0, %s111
    %s112 = sphi 0, %s109
    %s113 = sphi 0, %s112
    %s129 = sphi 0, %s113
  $region4: #{_forward_impl.2} parent=0 // loop_header_branch
    %13 = sbr.rel (%p11) target = $region8
  $region5: #{_forward_impl.2} parent=0 // loop_body
    %s15 = ssub.s32 %s10, 1
    %s16 = ssub.s32 %s10, 2
    %s17 = sadd.s32 %s10, 1
    %s18 = ssub.s32 %s10, %s17
    %p19 = scmp.eq.s32.totalorder %s18, 0
    %s21 = sadd.s32 %s20, 1
    %s22 = scalar_select %p19, %s20, %s21
    %p25 = pneg %p19
    %p26 = scmp.eq.s32.totalorder %s10, 1
    %p27 = por %p25, %p26
    %p28 = scmp.ne.s32.totalorder %s20, %s23
    %p29 = scmp.eq.s32.totalorder %s10, 0
    %p30 = por %p28, %p29
    %p31 = scmp.ne.s32.totalorder %s20, %s23
    %p32 = scmp.eq.s32.totalorder %s15, 1
    %p33 = por %p31, %p32
    %p34 = scmp.ne.s32.totalorder %s23, %s24
    %p35 = scmp.eq.s32.totalorder %s15, 0
    %p36 = por %p34, %p35
    %p37 = scmp.ne.s32.totalorder %s23, %s24
    %p38 = scmp.eq.s32.totalorder %s16, 1
    %p39 = por %p37, %p38
    %p41 = scmp.ne.s32.totalorder %s24, %s40
    %p42 = scmp.eq.s32.totalorder %s16, 0
    %p43 = por %p41, %p42
    %s45 = sadd.s32 %s44, 1
    %p48 = scmp.eq.s32.totalorder %s10, 1
    %p49 = scmp.ne.s32.totalorder %s44, %s46
    %p50 = scmp.eq.s32.totalorder %s10, 0
    %p51 = por %p49, %p50
    %p52 = scmp.ne.s32.totalorder %s44, %s46
    %p53 = scmp.eq.s32.totalorder %s15, 1
    %p54 = por %p52, %p53
    %p55 = scmp.ne.s32.totalorder %s46, %s47
    %p56 = scmp.eq.s32.totalorder %s15, 0
    %p57 = por %p55, %p56
    %p58 = scmp.ne.s32.totalorder %s46, %s47
    %p59 = scmp.eq.s32.totalorder %s16, 1
    %p60 = por %p58, %p59
    %p62 = scmp.ne.s32.totalorder %s47, %s61
    %p63 = scmp.eq.s32.totalorder %s16, 0
    %p64 = por %p62, %p63
    %s66 = sadd.s32 %s65, 1
    %p69 = scmp.eq.s32.totalorder %s10, 1
    %p70 = scmp.ne.s32.totalorder %s65, %s67
    %p71 = scmp.eq.s32.totalorder %s10, 0
    %p72 = por %p70, %p71
    %p73 = scmp.ne.s32.totalorder %s65, %s67
    %p74 = scmp.eq.s32.totalorder %s15, 1
    %p75 = por %p73, %p74
    %p76 = scmp.ne.s32.totalorder %s67, %s68
    %p77 = scmp.eq.s32.totalorder %s15, 0
    %p78 = por %p76, %p77
    %p79 = scmp.ne.s32.totalorder %s67, %s68
    %p80 = scmp.eq.s32.totalorder %s16, 1
    %p81 = por %p79, %p80
    %p83 = scmp.ne.s32.totalorder %s68, %s82
    %p84 = scmp.eq.s32.totalorder %s16, 0
    %p85 = por %p83, %p84
    %s87 = sadd.s32 %s86, 1
    %p90 = scmp.eq.s32.totalorder %s10, 1
    %p91 = scmp.ne.s32.totalorder %s86, %s88
    %p92 = scmp.eq.s32.totalorder %s10, 0
    %p93 = por %p91, %p92
    %p94 = scmp.ne.s32.totalorder %s86, %s88
    %p95 = scmp.eq.s32.totalorder %s15, 1
    %p96 = por %p94, %p95
    %p97 = scmp.ne.s32.totalorder %s88, %s89
    %p98 = scmp.eq.s32.totalorder %s15, 0
    %p99 = por %p97, %p98
    %p100 = scmp.ne.s32.totalorder %s88, %s89
    %p101 = scmp.eq.s32.totalorder %s16, 1
    %p102 = por %p100, %p101
    %p104 = scmp.ne.s32.totalorder %s89, %s103
    %p105 = scmp.eq.s32.totalorder %s16, 0
    %p106 = por %p104, %p105
    %s107 = ssub.s32 %s10, %s17
    %p108 = scmp.eq.s32.totalorder %s107, 0
    %s110 = sadd.s32 %s109, 1
    %s111 = scalar_select %p108, %s109, %s110
    %p114 = pneg %p108
    %p115 = scmp.eq.s32.totalorder %s10, 1
    %p116 = por %p114, %p115
    %p117 = scmp.ne.s32.totalorder %s109, %s112
    %p118 = scmp.eq.s32.totalorder %s10, 0
    %p119 = por %p117, %p118
    %p120 = scmp.ne.s32.totalorder %s109, %s112
    %p121 = scmp.eq.s32.totalorder %s15, 1
    %p122 = por %p120, %p121
    %p123 = scmp.ne.s32.totalorder %s112, %s113
    %p124 = scmp.eq.s32.totalorder %s15, 0
    %p125 = por %p123, %p124
    %p126 = scmp.ne.s32.totalorder %s112, %s113
    %p127 = scmp.eq.s32.totalorder %s16, 1
    %p128 = por %p126, %p127
    %p130 = scmp.ne.s32.totalorder %s113, %s129
    %p131 = scmp.eq.s32.totalorder %s16, 0
    %p132 = por %p130, %p131
    %p133 = scmp.le.s32.totalorder 1, %s10
    %p134 = scmp.lt.s32.totalorder %s10, 3
    %p135 = pnand %p133, %p134
    %p136 = pneg %p135
    // Predicated region
    $region9: #{_forward_impl.2} parent=5 // pred_check
      _
    $region10: #{_forward_impl.2} parent=5 // pred_check_branch
      %138 = sbr.rel (%p135) target = $region12
    $region11: #{_forward_impl.2} parent=5 // pred_region
      %s139 = ssub.s32 %s10, 1
      // Predicated region
      $region13: #{_forward_impl.2} parent=11 // pred_check
        %p140 = pneg %p57
      $region14: #{_forward_impl.2} parent=11 // pred_check_branch
        %142 = sbr.rel (%p140) target = $region16
      $region15: #{_forward_impl.2} parent=11 // pred_region
        _
      $region16: #{_forward_impl.2} parent=11 // pred_fallthru
        _
      // Predicated region
      $region17: #{_forward_impl.2} parent=11 // pred_check
        %p143 = pneg %p78
      $region18: #{_forward_impl.2} parent=11 // pred_check_branch
        %145 = sbr.rel (%p143) target = $region20
      $region19: #{_forward_impl.2} parent=11 // pred_region
        _
      $region20: #{_forward_impl.2} parent=11 // pred_fallthru
        _
      // Predicated region
      $region21: #{_forward_impl.2} parent=11 // pred_check
        %p146 = pneg %p99
      $region22: #{_forward_impl.2} parent=11 // pred_check_branch
        %148 = sbr.rel (%p146) target = $region24
      $region23: #{_forward_impl.2} parent=11 // pred_region
        _
      $region24: #{_forward_impl.2} parent=11 // pred_fallthru
        _
    $region12: #{_forward_impl.2} parent=5 // pred_fallthru
      _
    %p149 = scmp.lt.s32.totalorder %s10, 2
    // Predicated region
    $region25: #{_forward_impl.2} parent=5 // pred_check
      %p150 = pneg %p149
    $region26: #{_forward_impl.2} parent=5 // pred_check_branch
      %152 = sbr.rel (%p150) target = $region28
    $region27: #{_forward_impl.2} parent=5 // pred_region
      // Predicated region
      $region29: #{_forward_impl.2} parent=27 // pred_check
        %p153 = pneg %p30
      $region30: #{_forward_impl.2} parent=27 // pred_check_branch
        %155 = sbr.rel (%p153) target = $region32
      $region31: #{_forward_impl.2} parent=27 // pred_region
        %p156 = scmp.lt.s32.totalorder %s10, 1
        %s157 = scalar_select %p156, %s10, 1
        %s158 = smul.addr %s157, 16
        %s159 = smul.addr %s158, 8
        %s160 = scalar_lea.vmem %s0, %s159
      $region32: #{_forward_impl.2} parent=27 // pred_fallthru
        _
    $region28: #{_forward_impl.2} parent=5 // pred_fallthru
      _
    %p161 = scmp.le.s32.totalorder 1, %s10
    %p162 = scmp.lt.s32.totalorder %s10, 3
    %p163 = pnand %p161, %p162
    %p164 = pneg %p163
    // Predicated region
    $region33: #{_forward_impl.2} parent=5 // pred_check
      _
    $region34: #{_forward_impl.2} parent=5 // pred_check_branch
      %166 = sbr.rel (%p163) target = $region36
    $region35: #{_forward_impl.2} parent=5 // pred_region
      %s167 = ssub.s32 %s10, 1
      %p168 = scmp.lt.s32.totalorder %s15, 1
      %s169 = scalar_select %p168, %s15, 1
      %s170 = smul.addr %s169, 16
      %s171 = smul.addr %s170, 8
      %s172 = scalar_lea.vmem %s0, %s171
      %p173 = pneg %p36
      %p174 = pneg %p33
      %p175 = pneg %p57
      %p176 = pneg %p54
      %p177 = pneg %p78
      %p178 = pneg %p75
      %p179 = pneg %p99
      %p180 = pneg %p96
      %p181 = pneg %p125
      %p182 = pneg %p122
      %p183 = scmp.lt.s32.totalorder %s15, 1
      %s184 = scalar_select %p183, %s15, 1
      %s185 = smul.addr %s184, 4
      %s186 = smul.addr %s185, 8
      %s187 = scalar_lea.vmem %s4, %s186
      %p188 = scmp.lt.s32.totalorder %s15, 1
      %s189 = scalar_select %p188, %s15, 1
      %s190 = smul.addr %s189, 16
      %s191 = smul.addr %s190, 8
      %s192 = scalar_lea.vmem %s0, %s191
      %p193 = scmp.lt.s32.totalorder %s15, 1
      %s194 = scalar_select %p193, %s15, 1
      %s195 = smul.addr %s194, 4
      %s196 = smul.addr %s195, 8
      %s197 = scalar_lea.vmem %s4, %s196
      %v198 = vld [vmem:[%s192] sm:$0xff]
      %v199 = vld [vmem:[%s192 + $0x8] sm:$0xff]
      %v200 = vld [vmem:[%s192 + $0x10] sm:$0xff]
      %v201 = vld [vmem:[%s192 + $0x18] sm:$0xff]
      %v202 = vld [vmem:[%s192 + $0x20] sm:$0xff]
      %v203 = vld [vmem:[%s192 + $0x28] sm:$0xff]
      %v204 = vld [vmem:[%s192 + $0x30] sm:$0xff]
      %v205 = vld [vmem:[%s192 + $0x38] sm:$0xff]
      %v206 = vld [vmem:[%s192 + $0x40] sm:$0xff]
      %v207 = vld [vmem:[%s192 + $0x48] sm:$0xff]
      %v208 = vld [vmem:[%s192 + $0x50] sm:$0xff]
      %v209 = vld [vmem:[%s192 + $0x58] sm:$0xff]
      %v210 = vld [vmem:[%s192 + $0x60] sm:$0xff]
      %v211 = vld [vmem:[%s192 + $0x68] sm:$0xff]
      %v212 = vld [vmem:[%s192 + $0x70] sm:$0xff]
      %v213 = vld [vmem:[%s192 + $0x78] sm:$0x1]
      %v214 = vld [vmem:[%s1] sm:$0xff]
      %v215 = vld [vmem:[%s1 + $0x8] sm:$0xff]
      %v216 = vld [vmem:[%s1 + $0x10] sm:$0xff]
      %v217 = vld [vmem:[%s1 + $0x18] sm:$0xff]
      %v218 = vld [vmem:[%s1 + $0x20] sm:$0xff]
      %v219 = vld [vmem:[%s1 + $0x28] sm:$0xff]
      %v220 = vld [vmem:[%s1 + $0x30] sm:$0xff]
      %v221 = vld [vmem:[%s1 + $0x38] sm:$0xff]
      %v222 = vld [vmem:[%s1 + $0x40] sm:$0xff]
      %v223 = vld [vmem:[%s1 + $0x48] sm:$0xff]
      %v224 = vld [vmem:[%s1 + $0x50] sm:$0xff]
      %v225 = vld [vmem:[%s1 + $0x58] sm:$0xff]
      %v226 = vld [vmem:[%s1 + $0x60] sm:$0xff]
      %v227 = vld [vmem:[%s1 + $0x68] sm:$0xff]
      %v228 = vld [vmem:[%s1 + $0x70] sm:$0xff]
      %v229 = vld [vmem:[%s1 + $0x78] sm:$0xff]
      %v230 = vld [vmem:[%s1 + $0x80] sm:$0xff]
      %v231 = vld [vmem:[%s1 + $0x88] sm:$0xff]
      %v232 = vld [vmem:[%s1 + $0x90] sm:$0xff]
      %v233 = vld [vmem:[%s1 + $0x98] sm:$0xff]
      %v234 = vld [vmem:[%s1 + $0xa0] sm:$0xff]
      %v235 = vld [vmem:[%s1 + $0xa8] sm:$0xff]
      %v236 = vld [vmem:[%s1 + $0xb0] sm:$0xff]
      %v237 = vld [vmem:[%s1 + $0xb8] sm:$0xff]
      %v238 = vld [vmem:[%s1 + $0xc0] sm:$0xff]
      %v239 = vld [vmem:[%s1 + $0xc8] sm:$0xff]
      %v240 = vld [vmem:[%s1 + $0xd0] sm:$0xff]
      %v241 = vld [vmem:[%s1 + $0xd8] sm:$0xff]
      %v242 = vld [vmem:[%s1 + $0xe0] sm:$0xff]
      %v243 = vld [vmem:[%s1 + $0xe8] sm:$0xff]
      %v244 = vld [vmem:[%s1 + $0xf0] sm:$0xff]
      %v245 = vld [vmem:[%s1 + $0xf8] sm:$0xff]
      %v246 = vld [vmem:[%s1 + $0x100] sm:$0xff]
      %v247 = vld [vmem:[%s1 + $0x108] sm:$0xff]
      %v248 = vld [vmem:[%s1 + $0x110] sm:$0xff]
      %v249 = vld [vmem:[%s1 + $0x118] sm:$0xff]
      %v250 = vld [vmem:[%s1 + $0x120] sm:$0xff]
      %v251 = vld [vmem:[%s1 + $0x128] sm:$0xff]
      %v252 = vld [vmem:[%s1 + $0x130] sm:$0xff]
      %v253 = vld [vmem:[%s1 + $0x138] sm:$0xff]
      %v254 = vld [vmem:[%s1 + $0x140] sm:$0xff]
      %v255 = vld [vmem:[%s1 + $0x148] sm:$0xff]
      %v256 = vld [vmem:[%s1 + $0x150] sm:$0xff]
      %v257 = vld [vmem:[%s1 + $0x158] sm:$0xff]
      %v258 = vld [vmem:[%s1 + $0x160] sm:$0xff]
      %v259 = vld [vmem:[%s1 + $0x168] sm:$0x1]
      %v260 = vld [vmem:[%s1 + $0x170] sm:$0x1]
      %v261 = vld [vmem:[%s1 + $0x178] sm:$0x1]
      %262 = vxpose.xlu0.b32.start [1/16] %v198, 128
      %263 = vxpose.xlu0.b32.cont [2/16] %v199, 128
      %264 = vxpose.xlu0.b32.cont [3/16] %v200, 128
      %265 = vxpose.xlu0.b32.cont [4/16] %v201, 128
      %266 = vxpose.xlu0.b32.cont [5/16] %v202, 128
      %267 = vxpose.xlu0.b32.cont [6/16] %v203, 128
      %268 = vxpose.xlu0.b32.cont [7/16] %v204, 128
      %269 = vxpose.xlu0.b32.cont [8/16] %v205, 128
      %270 = vxpose.xlu0.b32.cont [9/16] %v206, 128
      %271 = vxpose.xlu0.b32.cont [10/16] %v207, 128
      %272 = vxpose.xlu0.b32.cont [11/16] %v208, 128
      %273 = vxpose.xlu0.b32.cont [12/16] %v209, 128
      %274 = vxpose.xlu0.b32.cont [13/16] %v210, 128
      %275 = vxpose.xlu0.b32.cont [14/16] %v211, 128
      %276 = vxpose.xlu0.b32.cont [15/16] %v212, 128
      %277 = vxpose.xlu0.b32.end [16/16] %v213, 128
      %v278 = vpop.trf.xlu0
      %v279 = vpop.trf.xlu0
      %v280 = vpop.trf.xlu0
      %v281 = vpop.trf.xlu0
      %v282 = vpop.trf.xlu0
      %v283 = vpop.trf.xlu0
      %v284 = vpop.trf.xlu0
      %v285 = vpop.trf.xlu0
      %v286 = vpop.trf.xlu0
      %v287 = vpop.trf.xlu0
      %v288 = vpop.trf.xlu0
      %v289 = vpop.trf.xlu0
      %v290 = vpop.trf.xlu0
      %v291 = vpop.trf.xlu0
      %v292 = vpop.trf.xlu0
      %v293 = vpop.trf.xlu0
      %vm294 = vcmask 990208
      %v296 = vsel %vm294, %v278, 0
      %v299 = vsel %vm294, %v279, 0
      %v302 = vsel %vm294, %v280, 0
      %v305 = vsel %vm294, %v281, 0
      %vm307 = vcmask 1040384
      %v309 = vsel %vm307, %v259, 0
      %v312 = vsel %vm307, %v260, 0
      %v315 = vsel %vm307, %v261, 0
      %317 = vmatprep.subr.mxu0 %v215
      %318 = vmatpush1.msra.mxu0 %v214
      %319 = vmatprep.subr.mxu0 %v218
      %320 = vmatpush1.msra.mxu0 %v217
      %321 = vmatprep.subr.mxu0 %v221
      %322 = vmatpush1.msra.mxu0 %v220
      %323 = vmatprep.subr.mxu0 %v224
      %324 = vmatpush1.msra.mxu0 %v223
      %325 = vmatprep.subr.mxu0 %v227
      %326 = vmatpush1.msra.mxu0 %v226
      %327 = vmatprep.subr.mxu0 %v230
      %328 = vmatpush1.msra.mxu0 %v229
      %329 = vmatprep.subr.mxu0 %v233
      %330 = vmatpush1.msra.mxu0 %v232
      %331 = vmatprep.subr.mxu0 %v236
      %332 = vmatpush1.msra.mxu0 %v235
      %333 = vmatprep.subr.mxu0 %v239
      %334 = vmatpush1.msra.mxu0 %v238
      %335 = vmatprep.subr.mxu0 %v242
      %336 = vmatpush1.msra.mxu0 %v241
      %337 = vmatprep.subr.mxu0 %v245
      %338 = vmatpush1.msra.mxu0 %v244
      %339 = vmatprep.subr.mxu0 %v248
      %340 = vmatpush1.msra.mxu0 %v247
      %341 = vmatprep.subr.mxu0 %v251
      %342 = vmatpush1.msra.mxu0 %v250
      %343 = vmatprep.subr.mxu0 %v254
      %344 = vmatpush1.msra.mxu0 %v253
      %345 = vmatprep.subr.mxu0 %v257
      %346 = vmatpush1.msra.mxu0 %v256
      %347 = vmatprep.subr.mxu0 %v312
      %348 = vmatpush1.msra.mxu0 %v309
      %349 = vmatprep.subr.mxu0 0.0
      %350 = vmatpush1.msra.mxu0 0.0
      %351 = vmatprep.subr.mxu0 0.0
      %352 = vmatpush1.msra.mxu0 0.0
      %353 = vmatprep.subr.mxu0 0.0
      %354 = vmatpush1.msra.mxu0 0.0
      %355 = vmatprep.subr.mxu0 0.0
      %356 = vmatpush1.msra.mxu0 0.0
      %357 = vmatprep.subr.mxu0 0.0
      %358 = vmatpush1.msra.mxu0 0.0
      %359 = vmatprep.subr.mxu0 0.0
      %360 = vmatpush1.msra.mxu0 0.0
      %361 = vmatprep.subr.mxu0 0.0
      %362 = vmatpush1.msra.mxu0 0.0
      %363 = vmatprep.subr.mxu0 0.0
      %364 = vmatpush1.msra.mxu0 0.0
      %365 = vmatprep.subr.mxu0 0.0
      %366 = vmatpush1.msra.mxu0 0.0
      %367 = vmatprep.subr.mxu0 0.0
      %368 = vmatpush1.msra.mxu0 0.0
      %369 = vmatprep.subr.mxu0 0.0
      %370 = vmatpush1.msra.mxu0 0.0
      %371 = vmatprep.subr.mxu0 0.0
      %372 = vmatpush1.msra.mxu0 0.0
      %373 = vmatprep.subr.mxu0 0.0
      %374 = vmatpush1.msra.mxu0 0.0
      %375 = vmatprep.subr.mxu0 0.0
      %376 = vmatpush1.msra.mxu0 0.0
      %377 = vmatprep.subr.mxu0 0.0
      %378 = vmatpush1.msra.mxu0 0.0
      %379 = vmatprep.subr.mxu0 0.0
      %380 = vmatpush1.msra.mxu0 0.0
      %381 = vmatprep.mubr.f32.mxu0 0.0
      %382 = vmatmul.mubr.f32.gmra.mrb[0].mxu0 %v296
      %v383 = vpop.f32.mrb[0].mxu0
      %v384 = vadd.f32 0.0, %v383
      %v385 = vpop.f32.mrb[0].mxu0
      %v386 = vadd.f32 0.0, %v385
      %387 = vmatprep.mubr.f32.mxu0 0.0
      %388 = vmatmul.mubr.f32.gmra.mrb[0].mxu0 %v299
      %v389 = vpop.f32.mrb[0].mxu0
      %v390 = vadd.f32 0.0, %v389
      %v391 = vpop.f32.mrb[0].mxu0
      %v392 = vadd.f32 0.0, %v391
      %393 = vmatprep.mubr.f32.mxu0 0.0
      %394 = vmatmul.mubr.f32.gmra.mrb[0].mxu0 %v302
      %v395 = vpop.f32.mrb[0].mxu0
      %v396 = vadd.f32 0.0, %v395
      %v397 = vpop.f32.mrb[0].mxu0
      %v398 = vadd.f32 0.0, %v397
      %399 = vmatprep.mubr.f32.mxu0 0.0
      %400 = vmatmul.mubr.f32.gmra.mrb[0].mxu0 %v305
      %v401 = vpop.f32.mrb[0].mxu0
      %v402 = vadd.f32 0.0, %v401
      %v403 = vpop.f32.mrb[0].mxu0
      %v404 = vadd.f32 0.0, %v403
      %405 = vdwg.mxu0
      %406 = vmatprep.subr.mxu0 0.0
      %407 = vmatpush1.msra.mxu0 %v216
      %408 = vmatprep.subr.mxu0 0.0
      %409 = vmatpush1.msra.mxu0 %v219
      %410 = vmatprep.subr.mxu0 0.0
      %411 = vmatpush1.msra.mxu0 %v222
      %412 = vmatprep.subr.mxu0 0.0
      %413 = vmatpush1.msra.mxu0 %v225
      %414 = vmatprep.subr.mxu0 0.0
      %415 = vmatpush1.msra.mxu0 %v228
      %416 = vmatprep.subr.mxu0 0.0
      %417 = vmatpush1.msra.mxu0 %v231
      %418 = vmatprep.subr.mxu0 0.0
      %419 = vmatpush1.msra.mxu0 %v234
      %420 = vmatprep.subr.mxu0 0.0
      %421 = vmatpush1.msra.mxu0 %v237
      %422 = vmatprep.subr.mxu0 0.0
      %423 = vmatpush1.msra.mxu0 %v240
      %424 = vmatprep.subr.mxu0 0.0
      %425 = vmatpush1.msra.mxu0 %v243
      %426 = vmatprep.subr.mxu0 0.0
      %427 = vmatpush1.msra.mxu0 %v246
      %428 = vmatprep.subr.mxu0 0.0
      %429 = vmatpush1.msra.mxu0 %v249
      %430 = vmatprep.subr.mxu0 0.0
      %431 = vmatpush1.msra.mxu0 %v252
      %432 = vmatprep.subr.mxu0 0.0
      %433 = vmatpush1.msra.mxu0 %v255
      %434 = vmatprep.subr.mxu0 0.0
      %435 = vmatpush1.msra.mxu0 %v258
      %436 = vmatprep.subr.mxu0 0.0
      %437 = vmatpush1.msra.mxu0 %v315
      %438 = vmatprep.subr.mxu0 0.0
      %439 = vmatpush1.msra.mxu0 0.0
      %440 = vmatprep.subr.mxu0 0.0
      %441 = vmatpush1.msra.mxu0 0.0
      %442 = vmatprep.subr.mxu0 0.0
      %443 = vmatpush1.msra.mxu0 0.0
      %444 = vmatprep.subr.mxu0 0.0
      %445 = vmatpush1.msra.mxu0 0.0
      %446 = vmatprep.subr.mxu0 0.0
      %447 = vmatpush1.msra.mxu0 0.0
      %448 = vmatprep.subr.mxu0 0.0
      %449 = vmatpush1.msra.mxu0 0.0
      %450 = vmatprep.subr.mxu0 0.0
      %451 = vmatpush1.msra.mxu0 0.0
      %452 = vmatprep.subr.mxu0 0.0
      %453 = vmatpush1.msra.mxu0 0.0
      %454 = vmatprep.subr.mxu0 0.0
      %455 = vmatpush1.msra.mxu0 0.0
      %456 = vmatprep.subr.mxu0 0.0
      %457 = vmatpush1.msra.mxu0 0.0
      %458 = vmatprep.subr.mxu0 0.0
      %459 = vmatpush1.msra.mxu0 0.0
      %460 = vmatprep.subr.mxu0 0.0
      %461 = vmatpush1.msra.mxu0 0.0
      %462 = vmatprep.subr.mxu0 0.0
      %463 = vmatpush1.msra.mxu0 0.0
      %464 = vmatprep.subr.mxu0 0.0
      %465 = vmatpush1.msra.mxu0 0.0
      %466 = vmatprep.subr.mxu0 0.0
      %467 = vmatpush1.msra.mxu0 0.0
      %468 = vmatprep.subr.mxu0 0.0
      %469 = vmatpush1.msra.mxu0 0.0
      %470 = vmatprep.mubr.f32.mxu0 0.0
      %471 = vmatmul.mubr.f32.gmra.mrb[0].mxu0 %v296
      %v472 = vpop.f32.mrb[0].mxu0
      %v473 = vadd.f32 0.0, %v472
      %v474 = vpop.f32.mrb[0].mxu0
      %475 = vmatprep.mubr.f32.mxu0 0.0
      %476 = vmatmul.mubr.f32.gmra.mrb[0].mxu0 %v299
      %v477 = vpop.f32.mrb[0].mxu0
      %v478 = vadd.f32 0.0, %v477
      %v479 = vpop.f32.mrb[0].mxu0
      %480 = vmatprep.mubr.f32.mxu0 0.0
      %481 = vmatmul.mubr.f32.gmra.mrb[0].mxu0 %v302
      %v482 = vpop.f32.mrb[0].mxu0
      %v483 = vadd.f32 0.0, %v482
      %v484 = vpop.f32.mrb[0].mxu0
      %485 = vmatprep.mubr.f32.mxu0 0.0
      %486 = vmatmul.mubr.f32.gmra.mrb[0].mxu0 %v305
      %v487 = vpop.f32.mrb[0].mxu0
      %v488 = vadd.f32 0.0, %v487
      %v489 = vpop.f32.mrb[0].mxu0
      %490 = vdwg.mxu0
      %491 = vmatprep.subr.mxu0 0.0
      %492 = vmatpush1.xpose.msra.mxu0 %v386
      %493 = vmatprep.subr.mxu0 0.0
      %494 = vmatpush1.xpose.msra.mxu0 %v392
      %495 = vmatprep.subr.mxu0 0.0
      %496 = vmatpush1.xpose.msra.mxu0 %v398
      %497 = vmatprep.subr.mxu0 0.0
      %498 = vmatpush1.xpose.msra.mxu0 %v404
      %499 = vmatprep.subr.mxu0 0.0
      %500 = vmatpush1.xpose.msra.mxu0 0.0
      %501 = vmatprep.subr.mxu0 0.0
      %502 = vmatpush1.xpose.msra.mxu0 0.0
      %503 = vmatprep.subr.mxu0 0.0
      %504 = vmatpush1.xpose.msra.mxu0 0.0
      %505 = vmatprep.subr.mxu0 0.0
      %506 = vmatpush1.xpose.msra.mxu0 0.0
      %507 = vmatprep.subr.mxu0 0.0
      %508 = vmatpush1.xpose.msra.mxu0 0.0
      %509 = vmatprep.subr.mxu0 0.0
      %510 = vmatpush1.xpose.msra.mxu0 0.0
      %511 = vmatprep.subr.mxu0 0.0
      %512 = vmatpush1.xpose.msra.mxu0 0.0
      %513 = vmatprep.subr.mxu0 0.0
      %514 = vmatpush1.xpose.msra.mxu0 0.0
      %515 = vmatprep.subr.mxu0 0.0
      %516 = vmatpush1.xpose.msra.mxu0 0.0
      %517 = vmatprep.subr.mxu0 0.0
      %518 = vmatpush1.xpose.msra.mxu0 0.0
      %519 = vmatprep.subr.mxu0 0.0
      %520 = vmatpush1.xpose.msra.mxu0 0.0
      %521 = vmatprep.subr.mxu0 0.0
      %522 = vmatpush1.xpose.msra.mxu0 0.0
      %523 = vmatprep.subr.mxu0 0.0
      %524 = vmatpush1.xpose.msra.mxu0 0.0
      %525 = vmatprep.subr.mxu0 0.0
      %526 = vmatpush1.xpose.msra.mxu0 0.0
      %527 = vmatprep.subr.mxu0 0.0
      %528 = vmatpush1.xpose.msra.mxu0 0.0
      %529 = vmatprep.subr.mxu0 0.0
      %530 = vmatpush1.xpose.msra.mxu0 0.0
      %531 = vmatprep.subr.mxu0 0.0
      %532 = vmatpush1.xpose.msra.mxu0 0.0
      %533 = vmatprep.subr.mxu0 0.0
      %534 = vmatpush1.xpose.msra.mxu0 0.0
      %535 = vmatprep.subr.mxu0 0.0
      %536 = vmatpush1.xpose.msra.mxu0 0.0
      %537 = vmatprep.subr.mxu0 0.0
      %538 = vmatpush1.xpose.msra.mxu0 0.0
      %539 = vmatprep.subr.mxu0 0.0
      %540 = vmatpush1.xpose.msra.mxu0 0.0
      %541 = vmatprep.subr.mxu0 0.0
      %542 = vmatpush1.xpose.msra.mxu0 0.0
      %543 = vmatprep.subr.mxu0 0.0
      %544 = vmatpush1.xpose.msra.mxu0 0.0
      %545 = vmatprep.subr.mxu0 0.0
      %546 = vmatpush1.xpose.msra.mxu0 0.0
      %547 = vmatprep.subr.mxu0 0.0
      %548 = vmatpush1.xpose.msra.mxu0 0.0
      %549 = vmatprep.subr.mxu0 0.0
      %550 = vmatpush1.xpose.msra.mxu0 0.0
      %551 = vmatprep.subr.mxu0 0.0
      %552 = vmatpush1.xpose.msra.mxu0 0.0
      %553 = vmatprep.subr.mxu0 0.0
      %554 = vmatpush1.xpose.msra.mxu0 0.0
      %555 = vmatprep.mubr.f32.mxu0 0.0
      %556 = vmatmul.mubr.f32.gmra.mrb[0].mxu0 %v384
      %v557 = vpop.f32.mrb[0].mxu0
      %v558 = vadd.f32 0.0, %v557
      %v559 = vpop.f32.mrb[0].mxu0
      %560 = vmatprep.mubr.f32.mxu0 0.0
      %561 = vmatmul.mubr.f32.gmra.mrb[0].mxu0 %v390
      %v562 = vpop.f32.mrb[0].mxu0
      %v563 = vadd.f32 0.0, %v562
      %v564 = vpop.f32.mrb[0].mxu0
      %565 = vmatprep.mubr.f32.mxu0 0.0
      %566 = vmatmul.mubr.f32.gmra.mrb[0].mxu0 %v396
      %v567 = vpop.f32.mrb[0].mxu0
      %v568 = vadd.f32 0.0, %v567
      %v569 = vpop.f32.mrb[0].mxu0
      %570 = vmatprep.mubr.f32.mxu0 0.0
      %571 = vmatmul.mubr.f32.gmra.mrb[0].mxu0 %v402
      %v572 = vpop.f32.mrb[0].mxu0
      %v573 = vadd.f32 0.0, %v572
      %v574 = vpop.f32.mrb[0].mxu0
      %575 = vdwg.mxu0
      %vm576 = vcmask 261120
      %v577 = vsel %vm576, %v558, -inf
      %578 = vmax.xlane.f32.xlu0 %v577
      %v579 = vpop.xlane.xlu0 %578
      %v580 = vsel %vm576, %v563, -inf
      %581 = vmax.xlane.f32.xlu0 %v580
      %v582 = vpop.xlane.xlu0 %581
      %v583 = vsel %vm576, %v568, -inf
      %584 = vmax.xlane.f32.xlu0 %v583
      %v585 = vpop.xlane.xlu0 %584
      %v586 = vsel %vm576, %v573, -inf
      %587 = vmax.xlane.f32.xlu0 %v586
      %v588 = vpop.xlane.xlu0 %587
      %v589 = vsub.f32 %v558, %v579
      %v590 = vsub.f32 %v563, %v582
      %v591 = vsub.f32 %v568, %v585
      %v592 = vsub.f32 %v573, %v588
      %v593 = vmul.f32 %v589, 1.442695
      %v594 = vpow.pop %v593
      %v595 = vmul.f32 %v590, 1.442695
      %v596 = vpow.pop %v595
      %v597 = vmul.f32 %v591, 1.442695
      %v598 = vpow.pop %v597
      %v599 = vmul.f32 %v592, 1.442695
      %v600 = vpow.pop %v599
      %v601 = vsel %vm576, %v594, 0.0
      %602 = vadd.xlane.f32.xlu0 %v601
      %v603 = vpop.xlane.xlu0 %602
      %v604 = vsel %vm576, %v596, 0.0
      %605 = vadd.xlane.f32.xlu0 %v604
      %v606 = vpop.xlane.xlu0 %605
      %v607 = vsel %vm576, %v598, 0.0
      %608 = vadd.xlane.f32.xlu0 %v607
      %v609 = vpop.xlane.xlu0 %608
      %v610 = vsel %vm576, %v600, 0.0
      %611 = vadd.xlane.f32.xlu0 %v610
      %v612 = vpop.xlane.xlu0 %611
      %v613 = vrcp.pop %v603
      %v614 = vrcp.pop %v606
      %v615 = vrcp.pop %v609
      %v616 = vrcp.pop %v612
      %v617 = vmul.f32 %v594, %v613
      %v618 = vmul.f32 %v596, %v614
      %v619 = vmul.f32 %v598, %v615
      %v620 = vmul.f32 %v600, %v616
      %v622 = vsel %vm576, %v617, 0
      %v625 = vsel %vm576, %v618, 0
      %v628 = vsel %vm576, %v619, 0
      %v631 = vsel %vm576, %v620, 0
      %633 = vmatprep.subr.mxu0 0.0
      %634 = vmatpush1.msra.mxu0 %v473
      %635 = vmatprep.subr.mxu0 0.0
      %636 = vmatpush1.msra.mxu0 %v478
      %637 = vmatprep.subr.mxu0 0.0
      %638 = vmatpush1.msra.mxu0 %v483
      %639 = vmatprep.subr.mxu0 0.0
      %640 = vmatpush1.msra.mxu0 %v488
      %641 = vmatprep.subr.mxu0 0.0
      %642 = vmatpush1.msra.mxu0 0.0
      %643 = vmatprep.subr.mxu0 0.0
      %644 = vmatpush1.msra.mxu0 0.0
      %645 = vmatprep.subr.mxu0 0.0
      %646 = vmatpush1.msra.mxu0 0.0
      %647 = vmatprep.subr.mxu0 0.0
      %648 = vmatpush1.msra.mxu0 0.0
      %649 = vmatprep.subr.mxu0 0.0
      %650 = vmatpush1.msra.mxu0 0.0
      %651 = vmatprep.subr.mxu0 0.0
      %652 = vmatpush1.msra.mxu0 0.0
      %653 = vmatprep.subr.mxu0 0.0
      %654 = vmatpush1.msra.mxu0 0.0
      %655 = vmatprep.subr.mxu0 0.0
      %656 = vmatpush1.msra.mxu0 0.0
      %657 = vmatprep.subr.mxu0 0.0
      %658 = vmatpush1.msra.mxu0 0.0
      %659 = vmatprep.subr.mxu0 0.0
      %660 = vmatpush1.msra.mxu0 0.0
      %661 = vmatprep.subr.mxu0 0.0
      %662 = vmatpush1.msra.mxu0 0.0
      %663 = vmatprep.subr.mxu0 0.0
      %664 = vmatpush1.msra.mxu0 0.0
      %665 = vmatprep.subr.mxu0 0.0
      %666 = vmatpush1.msra.mxu0 0.0
      %667 = vmatprep.subr.mxu0 0.0
      %668 = vmatpush1.msra.mxu0 0.0
      %669 = vmatprep.subr.mxu0 0.0
      %670 = vmatpush1.msra.mxu0 0.0
      %671 = vmatprep.subr.mxu0 0.0
      %672 = vmatpush1.msra.mxu0 0.0
      %673 = vmatprep.subr.mxu0 0.0
      %674 = vmatpush1.msra.mxu0 0.0
      %675 = vmatprep.subr.mxu0 0.0
      %676 = vmatpush1.msra.mxu0 0.0
      %677 = vmatprep.subr.mxu0 0.0
      %678 = vmatpush1.msra.mxu0 0.0
      %679 = vmatprep.subr.mxu0 0.0
      %680 = vmatpush1.msra.mxu0 0.0
      %681 = vmatprep.subr.mxu0 0.0
      %682 = vmatpush1.msra.mxu0 0.0
      %683 = vmatprep.subr.mxu0 0.0
      %684 = vmatpush1.msra.mxu0 0.0
      %685 = vmatprep.subr.mxu0 0.0
      %686 = vmatpush1.msra.mxu0 0.0
      %687 = vmatprep.subr.mxu0 0.0
      %688 = vmatpush1.msra.mxu0 0.0
      %689 = vmatprep.subr.mxu0 0.0
      %690 = vmatpush1.msra.mxu0 0.0
      %691 = vmatprep.subr.mxu0 0.0
      %692 = vmatpush1.msra.mxu0 0.0
      %693 = vmatprep.subr.mxu0 0.0
      %694 = vmatpush1.msra.mxu0 0.0
      %695 = vmatprep.subr.mxu0 0.0
      %696 = vmatpush1.msra.mxu0 0.0
      %697 = vmatprep.mubr.f32.mxu0 0.0
      %698 = vmatmul.mubr.f32.gmra.mrb[0].mxu0 %v622
      %v699 = vpop.f32.mrb[0].mxu0
      %v700 = vadd.f32 0.0, %v699
      %v701 = vpop.f32.mrb[0].mxu0
      %702 = vmatprep.mubr.f32.mxu0 0.0
      %703 = vmatmul.mubr.f32.gmra.mrb[0].mxu0 %v625
      %v704 = vpop.f32.mrb[0].mxu0
      %v705 = vadd.f32 0.0, %v704
      %v706 = vpop.f32.mrb[0].mxu0
      %707 = vmatprep.mubr.f32.mxu0 0.0
      %708 = vmatmul.mubr.f32.gmra.mrb[0].mxu0 %v628
      %v709 = vpop.f32.mrb[0].mxu0
      %v710 = vadd.f32 0.0, %v709
      %v711 = vpop.f32.mrb[0].mxu0
      %712 = vmatprep.mubr.f32.mxu0 0.0
      %713 = vmatmul.mubr.f32.gmra.mrb[0].mxu0 %v631
      %v714 = vpop.f32.mrb[0].mxu0
      %v715 = vadd.f32 0.0, %v714
      %v716 = vpop.f32.mrb[0].mxu0
      %717 = vdwg.mxu0
      %v718 = vld [vmem:[%s2] sm:$0xff]
      %v719 = vld [vmem:[%s2 + $0x8] sm:$0xff]
      %v720 = vld [vmem:[%s2 + $0x10] sm:$0xff]
      %v721 = vld [vmem:[%s2 + $0x18] sm:$0xff]
      %v722 = vld [vmem:[%s2 + $0x20] sm:$0xff]
      %v723 = vld [vmem:[%s2 + $0x28] sm:$0xff]
      %v724 = vld [vmem:[%s2 + $0x30] sm:$0xff]
      %v725 = vld [vmem:[%s2 + $0x38] sm:$0xff]
      %v726 = vld [vmem:[%s2 + $0x40] sm:$0xff]
      %v727 = vld [vmem:[%s2 + $0x48] sm:$0xff]
      %v728 = vld [vmem:[%s2 + $0x50] sm:$0xff]
      %v729 = vld [vmem:[%s2 + $0x58] sm:$0xff]
      %v730 = vld [vmem:[%s2 + $0x60] sm:$0xff]
      %v731 = vld [vmem:[%s2 + $0x68] sm:$0xff]
      %v732 = vld [vmem:[%s2 + $0x70] sm:$0xff]
      %v733 = vld [vmem:[%s2 + $0x78] sm:$0xff]
      %v734 = vld [vmem:[%s3] sm:$0x1]
      %v736 = vlaneseq
      %v737 = vshrl.u32 %v736, 7
      %v738 = vsub.s32 0, %v737
      %v739 = vrot.slane %v734, %v738
      %741 = vmatprep.subr.mxu0 0.0
      %742 = vmatpush1.msra.mxu0 %v718
      %743 = vmatprep.subr.mxu0 0.0
      %744 = vmatpush1.msra.mxu0 %v719
      %745 = vmatprep.subr.mxu0 0.0
      %746 = vmatpush1.msra.mxu0 %v720
      %747 = vmatprep.subr.mxu0 0.0
      %748 = vmatpush1.msra.mxu0 %v721
      %749 = vmatprep.subr.mxu0 0.0
      %750 = vmatpush1.msra.mxu0 %v722
      %751 = vmatprep.subr.mxu0 0.0
      %752 = vmatpush1.msra.mxu0 %v723
      %753 = vmatprep.subr.mxu0 0.0
      %754 = vmatpush1.msra.mxu0 %v724
      %755 = vmatprep.subr.mxu0 0.0
      %756 = vmatpush1.msra.mxu0 %v725
      %757 = vmatprep.subr.mxu0 0.0
      %758 = vmatpush1.msra.mxu0 %v726
      %759 = vmatprep.subr.mxu0 0.0
      %760 = vmatpush1.msra.mxu0 %v727
      %761 = vmatprep.subr.mxu0 0.0
      %762 = vmatpush1.msra.mxu0 %v728
      %763 = vmatprep.subr.mxu0 0.0
      %764 = vmatpush1.msra.mxu0 %v729
      %765 = vmatprep.subr.mxu0 0.0
      %766 = vmatpush1.msra.mxu0 %v730
      %767 = vmatprep.subr.mxu0 0.0
      %768 = vmatpush1.msra.mxu0 %v731
      %769 = vmatprep.subr.mxu0 0.0
      %770 = vmatpush1.msra.mxu0 %v732
      %771 = vmatprep.subr.mxu0 0.0
      %772 = vmatpush1.msra.mxu0 %v733
      %773 = vmatprep.subr.mxu0 0.0
      %774 = vmatpush1.msra.mxu0 0.0
      %775 = vmatprep.subr.mxu0 0.0
      %776 = vmatpush1.msra.mxu0 0.0
      %777 = vmatprep.subr.mxu0 0.0
      %778 = vmatpush1.msra.mxu0 0.0
      %779 = vmatprep.subr.mxu0 0.0
      %780 = vmatpush1.msra.mxu0 0.0
      %781 = vmatprep.subr.mxu0 0.0
      %782 = vmatpush1.msra.mxu0 0.0
      %783 = vmatprep.subr.mxu0 0.0
      %784 = vmatpush1.msra.mxu0 0.0
      %785 = vmatprep.subr.mxu0 0.0
      %786 = vmatpush1.msra.mxu0 0.0
      %787 = vmatprep.subr.mxu0 0.0
      %788 = vmatpush1.msra.mxu0 0.0
      %789 = vmatprep.subr.mxu0 0.0
      %790 = vmatpush1.msra.mxu0 0.0
      %791 = vmatprep.subr.mxu0 0.0
      %792 = vmatpush1.msra.mxu0 0.0
      %793 = vmatprep.subr.mxu0 0.0
      %794 = vmatpush1.msra.mxu0 0.0
      %795 = vmatprep.subr.mxu0 0.0
      %796 = vmatpush1.msra.mxu0 0.0
      %797 = vmatprep.subr.mxu0 0.0
      %798 = vmatpush1.msra.mxu0 0.0
      %799 = vmatprep.subr.mxu0 0.0
      %800 = vmatpush1.msra.mxu0 0.0
      %801 = vmatprep.subr.mxu0 0.0
      %802 = vmatpush1.msra.mxu0 0.0
      %803 = vmatprep.subr.mxu0 0.0
      %804 = vmatpush1.msra.mxu0 0.0
      %805 = vmatprep.mubr.f32.mxu0 0.0
      %806 = vmatmul.mubr.f32.gmra.mrb[0].mxu0 %v700
      %v807 = vpop.f32.mrb[0].mxu0
      %v808 = vadd.f32 %v739, %v807
      %v809 = vpop.f32.mrb[0].mxu0
      %810 = vmatprep.mubr.f32.mxu0 0.0
      %811 = vmatmul.mubr.f32.gmra.mrb[0].mxu0 %v705
      %v812 = vpop.f32.mrb[0].mxu0
      %v813 = vadd.f32 %v739, %v812
      %v814 = vpop.f32.mrb[0].mxu0
      %815 = vmatprep.mubr.f32.mxu0 0.0
      %816 = vmatmul.mubr.f32.gmra.mrb[0].mxu0 %v710
      %v817 = vpop.f32.mrb[0].mxu0
      %v818 = vadd.f32 %v739, %v817
      %v819 = vpop.f32.mrb[0].mxu0
      %820 = vmatprep.mubr.f32.mxu0 0.0
      %821 = vmatmul.mubr.f32.gmra.mrb[0].mxu0 %v715
      %v822 = vpop.f32.mrb[0].mxu0
      %v823 = vadd.f32 %v739, %v822
      %v824 = vpop.f32.mrb[0].mxu0
      %825 = vdwg.mxu0
      %826 = vst.msk [vmem:[%s197] sm:$0xff] %vm294, %v808
      %827 = vst.msk [vmem:[%s197 + $0x8] sm:$0xff] %vm294, %v813
      %828 = vst.msk [vmem:[%s197 + $0x10] sm:$0xff] %vm294, %v818
      %829 = vst.msk [vmem:[%s197 + $0x18] sm:$0xff] %vm294, %v823
      %p830 = scmp.lt.s32.totalorder %s15, 1
      %s831 = scalar_select %p830, %s15, 1
      %s832 = smul.addr %s831, 4
      %s833 = smul.addr %s832, 8
      %s834 = scalar_lea.vmem %s4, %s833
      // Predicated region
      $region37: #{_forward_impl.2} parent=35 // pred_check
        %p835 = pneg %p122
      $region38: #{_forward_impl.2} parent=35 // pred_check_branch
        %837 = sbr.rel (%p835) target = $region40
      $region39: #{_forward_impl.2} parent=35 // pred_region
        _
      $region40: #{_forward_impl.2} parent=35 // pred_fallthru
        _
    $region36: #{_forward_impl.2} parent=5 // pred_fallthru
      _
    %p838 = scmp.le.s32.totalorder 2, %s10
    // Predicated region
    $region41: #{_forward_impl.2} parent=5 // pred_check
      %p839 = pneg %p838
    $region42: #{_forward_impl.2} parent=5 // pred_check_branch
      %841 = sbr.rel (%p839) target = $region44
    $region43: #{_forward_impl.2} parent=5 // pred_region
      %s842 = ssub.s32 %s10, 2
      // Predicated region
      $region45: #{_forward_impl.2} parent=43 // pred_check
        %p843 = pneg %p128
      $region46: #{_forward_impl.2} parent=43 // pred_check_branch
        %845 = sbr.rel (%p843) target = $region48
      $region47: #{_forward_impl.2} parent=43 // pred_region
        %p846 = scmp.lt.s32.totalorder %s16, 1
        %s847 = scalar_select %p846, %s16, 1
        %s848 = smul.addr %s847, 4
        %s849 = smul.addr %s848, 8
        %s850 = scalar_lea.vmem %s4, %s849
      $region48: #{_forward_impl.2} parent=43 // pred_fallthru
        _
    $region44: #{_forward_impl.2} parent=5 // pred_fallthru
      _
  $region6: #{_forward_impl.2} parent=0 // loop_footer
    %s14 = sadd.s32 1, %s10
  $region7: #{_forward_impl.2} parent=0 // loop_footer_branch
    %9 = sbr.rel target = $region3
  $region8: #{_forward_impl.2} parent=0 // loop_exit
    _

// kernel: _forward_impl.3
$region0: #{_forward_impl.3}
  #allocation0 [shape = 'u32[]', space=smem, size = 0x4, offset = 0x4, fixed_abs, tag = 'smem constant byte address 0x4 - core index']
  #allocation1 [shape = 'u32[144,128]{1,0:T(1,128)}', space=vmem, size = 0x12000, scoped, tag = 'internal scratch']
  %s0 = inlined_call_operand.vmem [shape: f32[2,121,32], index: 0, kind: input, shape index: {}]
  %s1 = inlined_call_operand.vmem [shape: f32[2,121,32], index: 1, kind: input, shape index: {}]
  %s2 = inlined_call_operand.vmem [shape: f32[1,32], index: 2, kind: input, shape index: {}]
  %s3 = inlined_call_operand.vmem [shape: f32[1,32], index: 3, kind: input, shape index: {}]
  %s4 = inlined_call_operand.vmem [shape: f32[1,32], index: 4, kind: input, shape index: {}]
  %s5 = inlined_call_operand.vmem [shape: f32[1,32], index: 5, kind: input, shape index: {}]
  %s6 = inlined_call_operand.vmem [shape: f32[32,128], index: 6, kind: input, shape index: {}]
  %s7 = inlined_call_operand.vmem [shape: f32[1,128], index: 7, kind: input, shape index: {}]
  %s8 = inlined_call_operand.vmem [shape: f32[128,32], index: 8, kind: input, shape index: {}]
  %s9 = inlined_call_operand.vmem [shape: f32[1,32], index: 9, kind: input, shape index: {}]
  %s10 = inlined_call_operand.vmem [shape: f32[2,121,32], index: 10, kind: output, shape index: {}]
  %s11 = sld [smem:[#allocation0]]
  $region73: #{_forward_impl.3} parent=0
    _
  %s13 = ssub.s32 1, %s11
  %s14 = scalar_select 0, %s13, %s11
  loop: start=0, step=1, limit=4
  $region2: #{_forward_impl.3} parent=0 // loop_pre_header
    _
  $region3: #{_forward_impl.3} parent=0 // loop_header
    %s16 = sphi 0, %s20
    %p17 = scmp.ge.s32.totalorder %s16, 4
    %s26 = sphi 0, %s28
    %s29 = sphi 0, %s26
    %s30 = sphi 0, %s29
    %s46 = sphi 0, %s30
    %s52 = sphi 0, %s54
    %s55 = sphi 0, %s52
    %s56 = sphi 0, %s55
    %s72 = sphi 0, %s56
    %s76 = sphi 0, %s76
    %s78 = sphi 0, %s76
    %s79 = sphi 0, %s78
    %s93 = sphi 0, %s79
    %s97 = sphi 0, %s97
    %s99 = sphi 0, %s97
    %s100 = sphi 0, %s99
    %s114 = sphi 0, %s100
    %s118 = sphi 0, %s118
    %s120 = sphi 0, %s118
    %s121 = sphi 0, %s120
    %s135 = sphi 0, %s121
    %s139 = sphi 0, %s139
    %s141 = sphi 0, %s139
    %s142 = sphi 0, %s141
    %s156 = sphi 0, %s142
    %s160 = sphi 0, %s160
    %s162 = sphi 0, %s160
    %s163 = sphi 0, %s162
    %s177 = sphi 0, %s163
    %s181 = sphi 0, %s181
    %s183 = sphi 0, %s181
    %s184 = sphi 0, %s183
    %s198 = sphi 0, %s184
    %s202 = sphi 0, %s202
    %s204 = sphi 0, %s202
    %s205 = sphi 0, %s204
    %s219 = sphi 0, %s205
    %s223 = sphi 0, %s223
    %s225 = sphi 0, %s223
    %s226 = sphi 0, %s225
    %s240 = sphi 0, %s226
    %s246 = sphi 0, %s248
    %s249 = sphi 0, %s246
    %s250 = sphi 0, %s249
    %s266 = sphi 0, %s250
  $region4: #{_forward_impl.3} parent=0 // loop_header_branch
    %19 = sbr.rel (%p17) target = $region8
  $region5: #{_forward_impl.3} parent=0 // loop_body
    %s21 = ssub.s32 %s16, 1
    %s22 = ssub.s32 %s16, 2
    %s23 = sadd.s32 %s16, 1
    %s24 = ssub.s32 %s16, %s23
    %p25 = scmp.eq.s32.totalorder %s24, 0
    %s27 = sadd.s32 %s26, 1
    %s28 = scalar_select %p25, %s26, %s27
    %p31 = pneg %p25
    %p32 = scmp.eq.s32.totalorder %s16, 1
    %p33 = por %p31, %p32
    %p34 = scmp.ne.s32.totalorder %s26, %s29
    %p35 = scmp.eq.s32.totalorder %s16, 0
    %p36 = por %p34, %p35
    %p37 = scmp.ne.s32.totalorder %s26, %s29
    %p38 = scmp.eq.s32.totalorder %s21, 1
    %p39 = por %p37, %p38
    %p40 = scmp.ne.s32.totalorder %s29, %s30
    %p41 = scmp.eq.s32.totalorder %s21, 0
    %p42 = por %p40, %p41
    %p43 = scmp.ne.s32.totalorder %s29, %s30
    %p44 = scmp.eq.s32.totalorder %s22, 1
    %p45 = por %p43, %p44
    %p47 = scmp.ne.s32.totalorder %s30, %s46
    %p48 = scmp.eq.s32.totalorder %s22, 0
    %p49 = por %p47, %p48
    %s50 = ssub.s32 %s16, %s23
    %p51 = scmp.eq.s32.totalorder %s50, 0
    %s53 = sadd.s32 %s52, 1
    %s54 = scalar_select %p51, %s52, %s53
    %p57 = pneg %p51
    %p58 = scmp.eq.s32.totalorder %s16, 1
    %p59 = por %p57, %p58
    %p60 = scmp.ne.s32.totalorder %s52, %s55
    %p61 = scmp.eq.s32.totalorder %s16, 0
    %p62 = por %p60, %p61
    %p63 = scmp.ne.s32.totalorder %s52, %s55
    %p64 = scmp.eq.s32.totalorder %s21, 1
    %p65 = por %p63, %p64
    %p66 = scmp.ne.s32.totalorder %s55, %s56
    %p67 = scmp.eq.s32.totalorder %s21, 0
    %p68 = por %p66, %p67
    %p69 = scmp.ne.s32.totalorder %s55, %s56
    %p70 = scmp.eq.s32.totalorder %s22, 1
    %p71 = por %p69, %p70
    %p73 = scmp.ne.s32.totalorder %s56, %s72
    %p74 = scmp.eq.s32.totalorder %s22, 0
    %p75 = por %p73, %p74
    %s77 = sadd.s32 %s76, 1
    %p80 = scmp.eq.s32.totalorder %s16, 1
    %p81 = scmp.ne.s32.totalorder %s76, %s78
    %p82 = scmp.eq.s32.totalorder %s16, 0
    %p83 = por %p81, %p82
    %p84 = scmp.ne.s32.totalorder %s76, %s78
    %p85 = scmp.eq.s32.totalorder %s21, 1
    %p86 = por %p84, %p85
    %p87 = scmp.ne.s32.totalorder %s78, %s79
    %p88 = scmp.eq.s32.totalorder %s21, 0
    %p89 = por %p87, %p88
    %p90 = scmp.ne.s32.totalorder %s78, %s79
    %p91 = scmp.eq.s32.totalorder %s22, 1
    %p92 = por %p90, %p91
    %p94 = scmp.ne.s32.totalorder %s79, %s93
    %p95 = scmp.eq.s32.totalorder %s22, 0
    %p96 = por %p94, %p95
    %s98 = sadd.s32 %s97, 1
    %p101 = scmp.eq.s32.totalorder %s16, 1
    %p102 = scmp.ne.s32.totalorder %s97, %s99
    %p103 = scmp.eq.s32.totalorder %s16, 0
    %p104 = por %p102, %p103
    %p105 = scmp.ne.s32.totalorder %s97, %s99
    %p106 = scmp.eq.s32.totalorder %s21, 1
    %p107 = por %p105, %p106
    %p108 = scmp.ne.s32.totalorder %s99, %s100
    %p109 = scmp.eq.s32.totalorder %s21, 0
    %p110 = por %p108, %p109
    %p111 = scmp.ne.s32.totalorder %s99, %s100
    %p112 = scmp.eq.s32.totalorder %s22, 1
    %p113 = por %p111, %p112
    %p115 = scmp.ne.s32.totalorder %s100, %s114
    %p116 = scmp.eq.s32.totalorder %s22, 0
    %p117 = por %p115, %p116
    %s119 = sadd.s32 %s118, 1
    %p122 = scmp.eq.s32.totalorder %s16, 1
    %p123 = scmp.ne.s32.totalorder %s118, %s120
    %p124 = scmp.eq.s32.totalorder %s16, 0
    %p125 = por %p123, %p124
    %p126 = scmp.ne.s32.totalorder %s118, %s120
    %p127 = scmp.eq.s32.totalorder %s21, 1
    %p128 = por %p126, %p127
    %p129 = scmp.ne.s32.totalorder %s120, %s121
    %p130 = scmp.eq.s32.totalorder %s21, 0
    %p131 = por %p129, %p130
    %p132 = scmp.ne.s32.totalorder %s120, %s121
    %p133 = scmp.eq.s32.totalorder %s22, 1
    %p134 = por %p132, %p133
    %p136 = scmp.ne.s32.totalorder %s121, %s135
    %p137 = scmp.eq.s32.totalorder %s22, 0
    %p138 = por %p136, %p137
    %s140 = sadd.s32 %s139, 1
    %p143 = scmp.eq.s32.totalorder %s16, 1
    %p144 = scmp.ne.s32.totalorder %s139, %s141
    %p145 = scmp.eq.s32.totalorder %s16, 0
    %p146 = por %p144, %p145
    %p147 = scmp.ne.s32.totalorder %s139, %s141
    %p148 = scmp.eq.s32.totalorder %s21, 1
    %p149 = por %p147, %p148
    %p150 = scmp.ne.s32.totalorder %s141, %s142
    %p151 = scmp.eq.s32.totalorder %s21, 0
    %p152 = por %p150, %p151
    %p153 = scmp.ne.s32.totalorder %s141, %s142
    %p154 = scmp.eq.s32.totalorder %s22, 1
    %p155 = por %p153, %p154
    %p157 = scmp.ne.s32.totalorder %s142, %s156
    %p158 = scmp.eq.s32.totalorder %s22, 0
    %p159 = por %p157, %p158
    %s161 = sadd.s32 %s160, 1
    %p164 = scmp.eq.s32.totalorder %s16, 1
    %p165 = scmp.ne.s32.totalorder %s160, %s162
    %p166 = scmp.eq.s32.totalorder %s16, 0
    %p167 = por %p165, %p166
    %p168 = scmp.ne.s32.totalorder %s160, %s162
    %p169 = scmp.eq.s32.totalorder %s21, 1
    %p170 = por %p168, %p169
    %p171 = scmp.ne.s32.totalorder %s162, %s163
    %p172 = scmp.eq.s32.totalorder %s21, 0
    %p173 = por %p171, %p172
    %p174 = scmp.ne.s32.totalorder %s162, %s163
    %p175 = scmp.eq.s32.totalorder %s22, 1
    %p176 = por %p174, %p175
    %p178 = scmp.ne.s32.totalorder %s163, %s177
    %p179 = scmp.eq.s32.totalorder %s22, 0
    %p180 = por %p178, %p179
    %s182 = sadd.s32 %s181, 1
    %p185 = scmp.eq.s32.totalorder %s16, 1
    %p186 = scmp.ne.s32.totalorder %s181, %s183
    %p187 = scmp.eq.s32.totalorder %s16, 0
    %p188 = por %p186, %p187
    %p189 = scmp.ne.s32.totalorder %s181, %s183
    %p190 = scmp.eq.s32.totalorder %s21, 1
    %p191 = por %p189, %p190
    %p192 = scmp.ne.s32.totalorder %s183, %s184
    %p193 = scmp.eq.s32.totalorder %s21, 0
    %p194 = por %p192, %p193
    %p195 = scmp.ne.s32.totalorder %s183, %s184
    %p196 = scmp.eq.s32.totalorder %s22, 1
    %p197 = por %p195, %p196
    %p199 = scmp.ne.s32.totalorder %s184, %s198
    %p200 = scmp.eq.s32.totalorder %s22, 0
    %p201 = por %p199, %p200
    %s203 = sadd.s32 %s202, 1
    %p206 = scmp.eq.s32.totalorder %s16, 1
    %p207 = scmp.ne.s32.totalorder %s202, %s204
    %p208 = scmp.eq.s32.totalorder %s16, 0
    %p209 = por %p207, %p208
    %p210 = scmp.ne.s32.totalorder %s202, %s204
    %p211 = scmp.eq.s32.totalorder %s21, 1
    %p212 = por %p210, %p211
    %p213 = scmp.ne.s32.totalorder %s204, %s205
    %p214 = scmp.eq.s32.totalorder %s21, 0
    %p215 = por %p213, %p214
    %p216 = scmp.ne.s32.totalorder %s204, %s205
    %p217 = scmp.eq.s32.totalorder %s22, 1
    %p218 = por %p216, %p217
    %p220 = scmp.ne.s32.totalorder %s205, %s219
    %p221 = scmp.eq.s32.totalorder %s22, 0
    %p222 = por %p220, %p221
    %s224 = sadd.s32 %s223, 1
    %p227 = scmp.eq.s32.totalorder %s16, 1
    %p228 = scmp.ne.s32.totalorder %s223, %s225
    %p229 = scmp.eq.s32.totalorder %s16, 0
    %p230 = por %p228, %p229
    %p231 = scmp.ne.s32.totalorder %s223, %s225
    %p232 = scmp.eq.s32.totalorder %s21, 1
    %p233 = por %p231, %p232
    %p234 = scmp.ne.s32.totalorder %s225, %s226
    %p235 = scmp.eq.s32.totalorder %s21, 0
    %p236 = por %p234, %p235
    %p237 = scmp.ne.s32.totalorder %s225, %s226
    %p238 = scmp.eq.s32.totalorder %s22, 1
    %p239 = por %p237, %p238
    %p241 = scmp.ne.s32.totalorder %s226, %s240
    %p242 = scmp.eq.s32.totalorder %s22, 0
    %p243 = por %p241, %p242
    %s244 = ssub.s32 %s16, %s23
    %p245 = scmp.eq.s32.totalorder %s244, 0
    %s247 = sadd.s32 %s246, 1
    %s248 = scalar_select %p245, %s246, %s247
    %p251 = pneg %p245
    %p252 = scmp.eq.s32.totalorder %s16, 1
    %p253 = por %p251, %p252
    %p254 = scmp.ne.s32.totalorder %s246, %s249
    %p255 = scmp.eq.s32.totalorder %s16, 0
    %p256 = por %p254, %p255
    %p257 = scmp.ne.s32.totalorder %s246, %s249
    %p258 = scmp.eq.s32.totalorder %s21, 1
    %p259 = por %p257, %p258
    %p260 = scmp.ne.s32.totalorder %s249, %s250
    %p261 = scmp.eq.s32.totalorder %s21, 0
    %p262 = por %p260, %p261
    %p263 = scmp.ne.s32.totalorder %s249, %s250
    %p264 = scmp.eq.s32.totalorder %s22, 1
    %p265 = por %p263, %p264
    %p267 = scmp.ne.s32.totalorder %s250, %s266
    %p268 = scmp.eq.s32.totalorder %s22, 0
    %p269 = por %p267, %p268
    %p270 = scmp.le.s32.totalorder 1, %s16
    %p271 = scmp.lt.s32.totalorder %s16, 3
    %p272 = pnand %p270, %p271
    %p273 = pneg %p272
    // Predicated region
    $region9: #{_forward_impl.3} parent=5 // pred_check
      _
    $region10: #{_forward_impl.3} parent=5 // pred_check_branch
      %275 = sbr.rel (%p272) target = $region12
    $region11: #{_forward_impl.3} parent=5 // pred_region
      %s276 = ssub.s32 %s16, 1
      // Predicated region
      $region13: #{_forward_impl.3} parent=11 // pred_check
        %p277 = pneg %p89
      $region14: #{_forward_impl.3} parent=11 // pred_check_branch
        %279 = sbr.rel (%p277) target = $region16
      $region15: #{_forward_impl.3} parent=11 // pred_region
        _
      $region16: #{_forward_impl.3} parent=11 // pred_fallthru
        _
      // Predicated region
      $region17: #{_forward_impl.3} parent=11 // pred_check
        %p280 = pneg %p110
      $region18: #{_forward_impl.3} parent=11 // pred_check_branch
        %282 = sbr.rel (%p280) target = $region20
      $region19: #{_forward_impl.3} parent=11 // pred_region
        _
      $region20: #{_forward_impl.3} parent=11 // pred_fallthru
        _
      // Predicated region
      $region21: #{_forward_impl.3} parent=11 // pred_check
        %p283 = pneg %p131
      $region22: #{_forward_impl.3} parent=11 // pred_check_branch
        %285 = sbr.rel (%p283) target = $region24
      $region23: #{_forward_impl.3} parent=11 // pred_region
        _
      $region24: #{_forward_impl.3} parent=11 // pred_fallthru
        _
      // Predicated region
      $region25: #{_forward_impl.3} parent=11 // pred_check
        %p286 = pneg %p152
      $region26: #{_forward_impl.3} parent=11 // pred_check_branch
        %288 = sbr.rel (%p286) target = $region28
      $region27: #{_forward_impl.3} parent=11 // pred_region
        _
      $region28: #{_forward_impl.3} parent=11 // pred_fallthru
        _
      // Predicated region
      $region29: #{_forward_impl.3} parent=11 // pred_check
        %p289 = pneg %p173
      $region30: #{_forward_impl.3} parent=11 // pred_check_branch
        %291 = sbr.rel (%p289) target = $region32
      $region31: #{_forward_impl.3} parent=11 // pred_region
        _
      $region32: #{_forward_impl.3} parent=11 // pred_fallthru
        _
      // Predicated region
      $region33: #{_forward_impl.3} parent=11 // pred_check
        %p292 = pneg %p194
      $region34: #{_forward_impl.3} parent=11 // pred_check_branch
        %294 = sbr.rel (%p292) target = $region36
      $region35: #{_forward_impl.3} parent=11 // pred_region
        _
      $region36: #{_forward_impl.3} parent=11 // pred_fallthru
        _
      // Predicated region
      $region37: #{_forward_impl.3} parent=11 // pred_check
        %p295 = pneg %p215
      $region38: #{_forward_impl.3} parent=11 // pred_check_branch
        %297 = sbr.rel (%p295) target = $region40
      $region39: #{_forward_impl.3} parent=11 // pred_region
        _
      $region40: #{_forward_impl.3} parent=11 // pred_fallthru
        _
      // Predicated region
      $region41: #{_forward_impl.3} parent=11 // pred_check
        %p298 = pneg %p236
      $region42: #{_forward_impl.3} parent=11 // pred_check_branch
        %300 = sbr.rel (%p298) target = $region44
      $region43: #{_forward_impl.3} parent=11 // pred_region
        _
      $region44: #{_forward_impl.3} parent=11 // pred_fallthru
        _
    $region12: #{_forward_impl.3} parent=5 // pred_fallthru
      _
    %p301 = scmp.lt.s32.totalorder %s16, 2
    // Predicated region
    $region45: #{_forward_impl.3} parent=5 // pred_check
      %p302 = pneg %p301
    $region46: #{_forward_impl.3} parent=5 // pred_check_branch
      %304 = sbr.rel (%p302) target = $region48
    $region47: #{_forward_impl.3} parent=5 // pred_region
      // Predicated region
      $region49: #{_forward_impl.3} parent=47 // pred_check
        %p305 = pneg %p36
      $region50: #{_forward_impl.3} parent=47 // pred_check_branch
        %307 = sbr.rel (%p305) target = $region52
      $region51: #{_forward_impl.3} parent=47 // pred_region
        %p308 = scmp.lt.s32.totalorder %s16, 1
        %s309 = scalar_select %p308, %s16, 1
        %s310 = smul.addr %s309, 16
        %s311 = smul.addr %s310, 8
        %s312 = scalar_lea.vmem %s0, %s311
      $region52: #{_forward_impl.3} parent=47 // pred_fallthru
        _
      // Predicated region
      $region53: #{_forward_impl.3} parent=47 // pred_check
        %p313 = pneg %p62
      $region54: #{_forward_impl.3} parent=47 // pred_check_branch
        %315 = sbr.rel (%p313) target = $region56
      $region55: #{_forward_impl.3} parent=47 // pred_region
        %p316 = scmp.lt.s32.totalorder %s16, 1
        %s317 = scalar_select %p316, %s16, 1
        %s318 = smul.addr %s317, 16
        %s319 = smul.addr %s318, 8
        %s320 = scalar_lea.vmem %s1, %s319
      $region56: #{_forward_impl.3} parent=47 // pred_fallthru
        _
    $region48: #{_forward_impl.3} parent=5 // pred_fallthru
      _
    %p321 = scmp.le.s32.totalorder 1, %s16
    %p322 = scmp.lt.s32.totalorder %s16, 3
    %p323 = pnand %p321, %p322
    %p324 = pneg %p323
    // Predicated region
    $region57: #{_forward_impl.3} parent=5 // pred_check
      _
    $region58: #{_forward_impl.3} parent=5 // pred_check_branch
      %326 = sbr.rel (%p323) target = $region60
    $region59: #{_forward_impl.3} parent=5 // pred_region
      %s327 = ssub.s32 %s16, 1
      %p328 = scmp.lt.s32.totalorder %s21, 1
      %s329 = scalar_select %p328, %s21, 1
      %s330 = smul.addr %s329, 16
      %s331 = smul.addr %s330, 8
      %s332 = scalar_lea.vmem %s0, %s331
      %p333 = pneg %p42
      %p334 = pneg %p39
      %p335 = scmp.lt.s32.totalorder %s21, 1
      %s336 = scalar_select %p335, %s21, 1
      %s337 = smul.addr %s336, 16
      %s338 = smul.addr %s337, 8
      %s339 = scalar_lea.vmem %s1, %s338
      %p340 = pneg %p68
      %p341 = pneg %p65
      %p342 = pneg %p89
      %p343 = pneg %p86
      %p344 = pneg %p110
      %p345 = pneg %p107
      %p346 = pneg %p131
      %p347 = pneg %p128
      %p348 = pneg %p152
      %p349 = pneg %p149
      %p350 = pneg %p173
      %p351 = pneg %p170
      %p352 = pneg %p194
      %p353 = pneg %p191
      %p354 = pneg %p215
      %p355 = pneg %p212
      %p356 = pneg %p236
      %p357 = pneg %p233
      %p358 = pneg %p262
      %p359 = pneg %p259
      %p360 = scmp.lt.s32.totalorder %s21, 1
      %s361 = scalar_select %p360, %s21, 1
      %s362 = smul.addr %s361, 16
      %s363 = smul.addr %s362, 8
      %s364 = scalar_lea.vmem %s10, %s363
      %p365 = scmp.lt.s32.totalorder %s21, 1
      %s366 = scalar_select %p365, %s21, 1
      %s367 = smul.addr %s366, 16
      %s368 = smul.addr %s367, 8
      %s369 = scalar_lea.vmem %s0, %s368
      %p370 = scmp.lt.s32.totalorder %s21, 1
      %s371 = scalar_select %p370, %s21, 1
      %s372 = smul.addr %s371, 16
      %s373 = smul.addr %s372, 8
      %s374 = scalar_lea.vmem %s1, %s373
      %p375 = scmp.lt.s32.totalorder %s21, 1
      %s376 = scalar_select %p375, %s21, 1
      %s377 = smul.addr %s376, 16
      %s378 = smul.addr %s377, 8
      %s379 = scalar_lea.vmem %s10, %s378
      %v380 = vld [vmem:[%s374] sm:$0xff]
      %v381 = vld [vmem:[%s374 + $0x8] sm:$0xff]
      %v382 = vld [vmem:[%s374 + $0x10] sm:$0xff]
      %v383 = vld [vmem:[%s374 + $0x18] sm:$0xff]
      %v384 = vld [vmem:[%s374 + $0x20] sm:$0xff]
      %v385 = vld [vmem:[%s374 + $0x28] sm:$0xff]
      %v386 = vld [vmem:[%s374 + $0x30] sm:$0xff]
      %v387 = vld [vmem:[%s374 + $0x38] sm:$0xff]
      %v388 = vld [vmem:[%s374 + $0x40] sm:$0xff]
      %v389 = vld [vmem:[%s374 + $0x48] sm:$0xff]
      %v390 = vld [vmem:[%s374 + $0x50] sm:$0xff]
      %v391 = vld [vmem:[%s374 + $0x58] sm:$0xff]
      %v392 = vld [vmem:[%s374 + $0x60] sm:$0xff]
      %v393 = vld [vmem:[%s374 + $0x68] sm:$0xff]
      %v394 = vld [vmem:[%s374 + $0x70] sm:$0xff]
      %v395 = vld [vmem:[%s374 + $0x78] sm:$0x1]
      %v396 = vld [vmem:[%s2] sm:$0x1]
      %v397 = vld [vmem:[%s3] sm:$0x1]
      %vm398 = vcmask 261120
      %v399 = vsel %vm398, %v380, 0.0
      %400 = vadd.xlane.f32.xlu0 %v399
      %v401 = vpop.xlane.xlu0 %400
      %v402 = vsel %vm398, %v381, 0.0
      %403 = vadd.xlane.f32.xlu0 %v402
      %v404 = vpop.xlane.xlu0 %403
      %v405 = vsel %vm398, %v382, 0.0
      %406 = vadd.xlane.f32.xlu0 %v405
      %v407 = vpop.xlane.xlu0 %406
      %v408 = vsel %vm398, %v383, 0.0
      %409 = vadd.xlane.f32.xlu0 %v408
      %v410 = vpop.xlane.xlu0 %409
      %v411 = vsel %vm398, %v384, 0.0
      %412 = vadd.xlane.f32.xlu0 %v411
      %v413 = vpop.xlane.xlu0 %412
      %v414 = vsel %vm398, %v385, 0.0
      %415 = vadd.xlane.f32.xlu0 %v414
      %v416 = vpop.xlane.xlu0 %415
      %v417 = vsel %vm398, %v386, 0.0
      %418 = vadd.xlane.f32.xlu0 %v417
      %v419 = vpop.xlane.xlu0 %418
      %v420 = vsel %vm398, %v387, 0.0
      %421 = vadd.xlane.f32.xlu0 %v420
      %v422 = vpop.xlane.xlu0 %421
      %v423 = vsel %vm398, %v388, 0.0
      %424 = vadd.xlane.f32.xlu0 %v423
      %v425 = vpop.xlane.xlu0 %424
      %v426 = vsel %vm398, %v389, 0.0
      %427 = vadd.xlane.f32.xlu0 %v426
      %v428 = vpop.xlane.xlu0 %427
      %v429 = vsel %vm398, %v390, 0.0
      %430 = vadd.xlane.f32.xlu0 %v429
      %v431 = vpop.xlane.xlu0 %430
      %v432 = vsel %vm398, %v391, 0.0
      %433 = vadd.xlane.f32.xlu0 %v432
      %v434 = vpop.xlane.xlu0 %433
      %v435 = vsel %vm398, %v392, 0.0
      %436 = vadd.xlane.f32.xlu0 %v435
      %v437 = vpop.xlane.xlu0 %436
      %v438 = vsel %vm398, %v393, 0.0
      %439 = vadd.xlane.f32.xlu0 %v438
      %v440 = vpop.xlane.xlu0 %439
      %v441 = vsel %vm398, %v394, 0.0
      %442 = vadd.xlane.f32.xlu0 %v441
      %v443 = vpop.xlane.xlu0 %442
      %vm444 = vcmask 253952
      %v445 = vsel %vm444, %v395, 0.0
      %446 = vadd.xlane.f32.xlu0 %v445
      %v447 = vpop.xlane.xlu0 %446
      %v448 = vrcp.pop 32.0
      %v449 = vmul.f32 %v401, %v448
      %v450 = vmul.f32 %v404, %v448
      %v451 = vmul.f32 %v407, %v448
      %v452 = vmul.f32 %v410, %v448
      %v453 = vmul.f32 %v413, %v448
      %v454 = vmul.f32 %v416, %v448
      %v455 = vmul.f32 %v419, %v448
      %v456 = vmul.f32 %v422, %v448
      %v457 = vmul.f32 %v425, %v448
      %v458 = vmul.f32 %v428, %v448
      %v459 = vmul.f32 %v431, %v448
      %v460 = vmul.f32 %v434, %v448
      %v461 = vmul.f32 %v437, %v448
      %v462 = vmul.f32 %v440, %v448
      %v463 = vmul.f32 %v443, %v448
      %v464 = vmul.f32 %v447, %v448
      %v465 = vsub.f32 %v380, %v449
      %v466 = vsub.f32 %v381, %v450
      %v467 = vsub.f32 %v382, %v451
      %v468 = vsub.f32 %v383, %v452
      %v469 = vsub.f32 %v384, %v453
      %v470 = vsub.f32 %v385, %v454
      %v471 = vsub.f32 %v386, %v455
      %v472 = vsub.f32 %v387, %v456
      %v473 = vsub.f32 %v388, %v457
      %v474 = vsub.f32 %v389, %v458
      %v475 = vsub.f32 %v390, %v459
      %v476 = vsub.f32 %v391, %v460
      %v477 = vsub.f32 %v392, %v461
      %v478 = vsub.f32 %v393, %v462
      %v479 = vsub.f32 %v394, %v463
      %v480 = vsub.f32 %v395, %v464
      %v481 = vmul.f32 %v465, %v465
      %v482 = vmul.f32 %v466, %v466
      %v483 = vmul.f32 %v467, %v467
      %v484 = vmul.f32 %v468, %v468
      %v485 = vmul.f32 %v469, %v469
      %v486 = vmul.f32 %v470, %v470
      %v487 = vmul.f32 %v471, %v471
      %v488 = vmul.f32 %v472, %v472
      %v489 = vmul.f32 %v473, %v473
      %v490 = vmul.f32 %v474, %v474
      %v491 = vmul.f32 %v475, %v475
      %v492 = vmul.f32 %v476, %v476
      %v493 = vmul.f32 %v477, %v477
      %v494 = vmul.f32 %v478, %v478
      %v495 = vmul.f32 %v479, %v479
      %v496 = vmul.f32 %v480, %v480
      %v497 = vsel %vm398, %v481, 0.0
      %498 = vadd.xlane.f32.xlu0 %v497
      %v499 = vpop.xlane.xlu0 %498
      %v500 = vsel %vm398, %v482, 0.0
      %501 = vadd.xlane.f32.xlu0 %v500
      %v502 = vpop.xlane.xlu0 %501
      %v503 = vsel %vm398, %v483, 0.0
      %504 = vadd.xlane.f32.xlu0 %v503
      %v505 = vpop.xlane.xlu0 %504
      %v506 = vsel %vm398, %v484, 0.0
      %507 = vadd.xlane.f32.xlu0 %v506
      %v508 = vpop.xlane.xlu0 %507
      %v509 = vsel %vm398, %v485, 0.0
      %510 = vadd.xlane.f32.xlu0 %v509
      %v511 = vpop.xlane.xlu0 %510
      %v512 = vsel %vm398, %v486, 0.0
      %513 = vadd.xlane.f32.xlu0 %v512
      %v514 = vpop.xlane.xlu0 %513
      %v515 = vsel %vm398, %v487, 0.0
      %516 = vadd.xlane.f32.xlu0 %v515
      %v517 = vpop.xlane.xlu0 %516
      %v518 = vsel %vm398, %v488, 0.0
      %519 = vadd.xlane.f32.xlu0 %v518
      %v520 = vpop.xlane.xlu0 %519
      %v521 = vsel %vm398, %v489, 0.0
      %522 = vadd.xlane.f32.xlu0 %v521
      %v523 = vpop.xlane.xlu0 %522
      %v524 = vsel %vm398, %v490, 0.0
      %525 = vadd.xlane.f32.xlu0 %v524
      %v526 = vpop.xlane.xlu0 %525
      %v527 = vsel %vm398, %v491, 0.0
      %528 = vadd.xlane.f32.xlu0 %v527
      %v529 = vpop.xlane.xlu0 %528
      %v530 = vsel %vm398, %v492, 0.0
      %531 = vadd.xlane.f32.xlu0 %v530
      %v532 = vpop.xlane.xlu0 %531
      %v533 = vsel %vm398, %v493, 0.0
      %534 = vadd.xlane.f32.xlu0 %v533
      %v535 = vpop.xlane.xlu0 %534
      %v536 = vsel %vm398, %v494, 0.0
      %537 = vadd.xlane.f32.xlu0 %v536
      %v538 = vpop.xlane.xlu0 %537
      %v539 = vsel %vm398, %v495, 0.0
      %540 = vadd.xlane.f32.xlu0 %v539
      %v541 = vpop.xlane.xlu0 %540
      %v542 = vsel %vm444, %v496, 0.0
      %543 = vadd.xlane.f32.xlu0 %v542
      %v544 = vpop.xlane.xlu0 %543
      %v545 = vmul.f32 %v499, %v448
      %v546 = vmul.f32 %v502, %v448
      %v547 = vmul.f32 %v505, %v448
      %v548 = vmul.f32 %v508, %v448
      %v549 = vmul.f32 %v511, %v448
      %v550 = vmul.f32 %v514, %v448
      %v551 = vmul.f32 %v517, %v448
      %v552 = vmul.f32 %v520, %v448
      %v553 = vmul.f32 %v523, %v448
      %v554 = vmul.f32 %v526, %v448
      %v555 = vmul.f32 %v529, %v448
      %v556 = vmul.f32 %v532, %v448
      %v557 = vmul.f32 %v535, %v448
      %v558 = vmul.f32 %v538, %v448
      %v559 = vmul.f32 %v541, %v448
      %v560 = vmul.f32 %v544, %v448
      %v561 = vadd.f32 %v545, 1e-05
      %v562 = vadd.f32 %v546, 1e-05
      %v563 = vadd.f32 %v547, 1e-05
      %v564 = vadd.f32 %v548, 1e-05
      %v565 = vadd.f32 %v549, 1e-05
      %v566 = vadd.f32 %v550, 1e-05
      %v567 = vadd.f32 %v551, 1e-05
      %v568 = vadd.f32 %v552, 1e-05
      %v569 = vadd.f32 %v553, 1e-05
      %v570 = vadd.f32 %v554, 1e-05
      %v571 = vadd.f32 %v555, 1e-05
      %v572 = vadd.f32 %v556, 1e-05
      %v573 = vadd.f32 %v557, 1e-05
      %v574 = vadd.f32 %v558, 1e-05
      %v575 = vadd.f32 %v559, 1e-05
      %v576 = vadd.f32 %v560, 1e-05
      %v577 = vrsqrt.pop %v561
      %v578 = vrsqrt.pop %v562
      %v579 = vrsqrt.pop %v563
      %v580 = vrsqrt.pop %v564
      %v581 = vrsqrt.pop %v565
      %v582 = vrsqrt.pop %v566
      %v583 = vrsqrt.pop %v567
      %v584 = vrsqrt.pop %v568
      %v585 = vrsqrt.pop %v569
      %v586 = vrsqrt.pop %v570
      %v587 = vrsqrt.pop %v571
      %v588 = vrsqrt.pop %v572
      %v589 = vrsqrt.pop %v573
      %v590 = vrsqrt.pop %v574
      %v591 = vrsqrt.pop %v575
      %v592 = vrsqrt.pop %v576
      %v593 = vmul.f32 %v465, %v577
      %v594 = vmul.f32 %v466, %v578
      %v595 = vmul.f32 %v467, %v579
      %v596 = vmul.f32 %v468, %v580
      %v597 = vmul.f32 %v469, %v581
      %v598 = vmul.f32 %v470, %v582
      %v599 = vmul.f32 %v471, %v583
      %v600 = vmul.f32 %v472, %v584
      %v601 = vmul.f32 %v473, %v585
      %v602 = vmul.f32 %v474, %v586
      %v603 = vmul.f32 %v475, %v587
      %v604 = vmul.f32 %v476, %v588
      %v605 = vmul.f32 %v477, %v589
      %v606 = vmul.f32 %v478, %v590
      %v607 = vmul.f32 %v479, %v591
      %v608 = vmul.f32 %v480, %v592
      %v610 = vlaneseq
      %v611 = vshrl.u32 %v610, 7
      %v612 = vsub.s32 0, %v611
      %v613 = vrot.slane %v396, %v612
      %v615 = vmul.f32 %v593, %v613
      %v616 = vmul.f32 %v594, %v613
      %v617 = vmul.f32 %v595, %v613
      %v618 = vmul.f32 %v596, %v613
      %v619 = vmul.f32 %v597, %v613
      %v620 = vmul.f32 %v598, %v613
      %v621 = vmul.f32 %v599, %v613
      %v622 = vmul.f32 %v600, %v613
      %v623 = vmul.f32 %v601, %v613
      %v624 = vmul.f32 %v602, %v613
      %v625 = vmul.f32 %v603, %v613
      %v626 = vmul.f32 %v604, %v613
      %v627 = vmul.f32 %v605, %v613
      %v628 = vmul.f32 %v606, %v613
      %v629 = vmul.f32 %v607, %v613
      %v630 = vmul.f32 %v608, %v613
      %v632 = vlaneseq
      %v633 = vshrl.u32 %v632, 7
      %v634 = vsub.s32 0, %v633
      %v635 = vrot.slane %v397, %v634
      %v637 = vadd.f32 %v615, %v635
      %v638 = vadd.f32 %v616, %v635
      %v639 = vadd.f32 %v617, %v635
      %v640 = vadd.f32 %v618, %v635
      %v641 = vadd.f32 %v619, %v635
      %v642 = vadd.f32 %v620, %v635
      %v643 = vadd.f32 %v621, %v635
      %v644 = vadd.f32 %v622, %v635
      %v645 = vadd.f32 %v623, %v635
      %v646 = vadd.f32 %v624, %v635
      %v647 = vadd.f32 %v625, %v635
      %v648 = vadd.f32 %v626, %v635
      %v649 = vadd.f32 %v627, %v635
      %v650 = vadd.f32 %v628, %v635
      %v651 = vadd.f32 %v629, %v635
      %v652 = vadd.f32 %v630, %v635
      %v653 = vld [vmem:[%s369] sm:$0xff]
      %v654 = vld [vmem:[%s369 + $0x8] sm:$0xff]
      %v655 = vld [vmem:[%s369 + $0x10] sm:$0xff]
      %v656 = vld [vmem:[%s369 + $0x18] sm:$0xff]
      %v657 = vld [vmem:[%s369 + $0x20] sm:$0xff]
      %v658 = vld [vmem:[%s369 + $0x28] sm:$0xff]
      %v659 = vld [vmem:[%s369 + $0x30] sm:$0xff]
      %v660 = vld [vmem:[%s369 + $0x38] sm:$0xff]
      %v661 = vld [vmem:[%s369 + $0x40] sm:$0xff]
      %v662 = vld [vmem:[%s369 + $0x48] sm:$0xff]
      %v663 = vld [vmem:[%s369 + $0x50] sm:$0xff]
      %v664 = vld [vmem:[%s369 + $0x58] sm:$0xff]
      %v665 = vld [vmem:[%s369 + $0x60] sm:$0xff]
      %v666 = vld [vmem:[%s369 + $0x68] sm:$0xff]
      %v667 = vld [vmem:[%s369 + $0x70] sm:$0xff]
      %v668 = vld [vmem:[%s369 + $0x78] sm:$0x1]
      %v669 = vadd.f32 %v653, %v637
      %v670 = vadd.f32 %v654, %v638
      %v671 = vadd.f32 %v655, %v639
      %v672 = vadd.f32 %v656, %v640
      %v673 = vadd.f32 %v657, %v641
      %v674 = vadd.f32 %v658, %v642
      %v675 = vadd.f32 %v659, %v643
      %v676 = vadd.f32 %v660, %v644
      %v677 = vadd.f32 %v661, %v645
      %v678 = vadd.f32 %v662, %v646
      %v679 = vadd.f32 %v663, %v647
      %v680 = vadd.f32 %v664, %v648
      %v681 = vadd.f32 %v665, %v649
      %v682 = vadd.f32 %v666, %v650
      %v683 = vadd.f32 %v667, %v651
      %v684 = vadd.f32 %v668, %v652
      %v685 = vld [vmem:[%s4] sm:$0x1]
      %v686 = vld [vmem:[%s5] sm:$0x1]
      %v687 = vsel %vm398, %v669, 0.0
      %688 = vadd.xlane.f32.xlu0 %v687
      %v689 = vpop.xlane.xlu0 %688
      %v690 = vsel %vm398, %v670, 0.0
      %691 = vadd.xlane.f32.xlu0 %v690
      %v692 = vpop.xlane.xlu0 %691
      %v693 = vsel %vm398, %v671, 0.0
      %694 = vadd.xlane.f32.xlu0 %v693
      %v695 = vpop.xlane.xlu0 %694
      %v696 = vsel %vm398, %v672, 0.0
      %697 = vadd.xlane.f32.xlu0 %v696
      %v698 = vpop.xlane.xlu0 %697
      %v699 = vsel %vm398, %v673, 0.0
      %700 = vadd.xlane.f32.xlu0 %v699
      %v701 = vpop.xlane.xlu0 %700
      %v702 = vsel %vm398, %v674, 0.0
      %703 = vadd.xlane.f32.xlu0 %v702
      %v704 = vpop.xlane.xlu0 %703
      %v705 = vsel %vm398, %v675, 0.0
      %706 = vadd.xlane.f32.xlu0 %v705
      %v707 = vpop.xlane.xlu0 %706
      %v708 = vsel %vm398, %v676, 0.0
      %709 = vadd.xlane.f32.xlu0 %v708
      %v710 = vpop.xlane.xlu0 %709
      %v711 = vsel %vm398, %v677, 0.0
      %712 = vadd.xlane.f32.xlu0 %v711
      %v713 = vpop.xlane.xlu0 %712
      %v714 = vsel %vm398, %v678, 0.0
      %715 = vadd.xlane.f32.xlu0 %v714
      %v716 = vpop.xlane.xlu0 %715
      %v717 = vsel %vm398, %v679, 0.0
      %718 = vadd.xlane.f32.xlu0 %v717
      %v719 = vpop.xlane.xlu0 %718
      %v720 = vsel %vm398, %v680, 0.0
      %721 = vadd.xlane.f32.xlu0 %v720
      %v722 = vpop.xlane.xlu0 %721
      %v723 = vsel %vm398, %v681, 0.0
      %724 = vadd.xlane.f32.xlu0 %v723
      %v725 = vpop.xlane.xlu0 %724
      %v726 = vsel %vm398, %v682, 0.0
      %727 = vadd.xlane.f32.xlu0 %v726
      %v728 = vpop.xlane.xlu0 %727
      %v729 = vsel %vm398, %v683, 0.0
      %730 = vadd.xlane.f32.xlu0 %v729
      %v731 = vpop.xlane.xlu0 %730
      %v732 = vsel %vm444, %v684, 0.0
      %733 = vadd.xlane.f32.xlu0 %v732
      %v734 = vpop.xlane.xlu0 %733
      %v735 = vmul.f32 %v689, %v448
      %v736 = vmul.f32 %v692, %v448
      %v737 = vmul.f32 %v695, %v448
      %v738 = vmul.f32 %v698, %v448
      %v739 = vmul.f32 %v701, %v448
      %v740 = vmul.f32 %v704, %v448
      %v741 = vmul.f32 %v707, %v448
      %v742 = vmul.f32 %v710, %v448
      %v743 = vmul.f32 %v713, %v448
      %v744 = vmul.f32 %v716, %v448
      %v745 = vmul.f32 %v719, %v448
      %v746 = vmul.f32 %v722, %v448
      %v747 = vmul.f32 %v725, %v448
      %v748 = vmul.f32 %v728, %v448
      %v749 = vmul.f32 %v731, %v448
      %v750 = vmul.f32 %v734, %v448
      %v751 = vsub.f32 %v669, %v735
      %v752 = vsub.f32 %v670, %v736
      %v753 = vsub.f32 %v671, %v737
      %v754 = vsub.f32 %v672, %v738
      %v755 = vsub.f32 %v673, %v739
      %v756 = vsub.f32 %v674, %v740
      %v757 = vsub.f32 %v675, %v741
      %v758 = vsub.f32 %v676, %v742
      %v759 = vsub.f32 %v677, %v743
      %v760 = vsub.f32 %v678, %v744
      %v761 = vsub.f32 %v679, %v745
      %v762 = vsub.f32 %v680, %v746
      %v763 = vsub.f32 %v681, %v747
      %v764 = vsub.f32 %v682, %v748
      %v765 = vsub.f32 %v683, %v749
      %v766 = vsub.f32 %v684, %v750
      %v767 = vmul.f32 %v751, %v751
      %v768 = vmul.f32 %v752, %v752
      %v769 = vmul.f32 %v753, %v753
      %v770 = vmul.f32 %v754, %v754
      %v771 = vmul.f32 %v755, %v755
      %v772 = vmul.f32 %v756, %v756
      %v773 = vmul.f32 %v757, %v757
      %v774 = vmul.f32 %v758, %v758
      %v775 = vmul.f32 %v759, %v759
      %v776 = vmul.f32 %v760, %v760
      %v777 = vmul.f32 %v761, %v761
      %v778 = vmul.f32 %v762, %v762
      %v779 = vmul.f32 %v763, %v763
      %v780 = vmul.f32 %v764, %v764
      %v781 = vmul.f32 %v765, %v765
      %v782 = vmul.f32 %v766, %v766
      %v783 = vsel %vm398, %v767, 0.0
      %784 = vadd.xlane.f32.xlu0 %v783
      %v785 = vpop.xlane.xlu0 %784
      %v786 = vsel %vm398, %v768, 0.0
      %787 = vadd.xlane.f32.xlu0 %v786
      %v788 = vpop.xlane.xlu0 %787
      %v789 = vsel %vm398, %v769, 0.0
      %790 = vadd.xlane.f32.xlu0 %v789
      %v791 = vpop.xlane.xlu0 %790
      %v792 = vsel %vm398, %v770, 0.0
      %793 = vadd.xlane.f32.xlu0 %v792
      %v794 = vpop.xlane.xlu0 %793
      %v795 = vsel %vm398, %v771, 0.0
      %796 = vadd.xlane.f32.xlu0 %v795
      %v797 = vpop.xlane.xlu0 %796
      %v798 = vsel %vm398, %v772, 0.0
      %799 = vadd.xlane.f32.xlu0 %v798
      %v800 = vpop.xlane.xlu0 %799
      %v801 = vsel %vm398, %v773, 0.0
      %802 = vadd.xlane.f32.xlu0 %v801
      %v803 = vpop.xlane.xlu0 %802
      %v804 = vsel %vm398, %v774, 0.0
      %805 = vadd.xlane.f32.xlu0 %v804
      %v806 = vpop.xlane.xlu0 %805
      %v807 = vsel %vm398, %v775, 0.0
      %808 = vadd.xlane.f32.xlu0 %v807
      %v809 = vpop.xlane.xlu0 %808
      %v810 = vsel %vm398, %v776, 0.0
      %811 = vadd.xlane.f32.xlu0 %v810
      %v812 = vpop.xlane.xlu0 %811
      %v813 = vsel %vm398, %v777, 0.0
      %814 = vadd.xlane.f32.xlu0 %v813
      %v815 = vpop.xlane.xlu0 %814
      %v816 = vsel %vm398, %v778, 0.0
      %817 = vadd.xlane.f32.xlu0 %v816
      %v818 = vpop.xlane.xlu0 %817
      %v819 = vsel %vm398, %v779, 0.0
      %820 = vadd.xlane.f32.xlu0 %v819
      %v821 = vpop.xlane.xlu0 %820
      %v822 = vsel %vm398, %v780, 0.0
      %823 = vadd.xlane.f32.xlu0 %v822
      %v824 = vpop.xlane.xlu0 %823
      %v825 = vsel %vm398, %v781, 0.0
      %826 = vadd.xlane.f32.xlu0 %v825
      %v827 = vpop.xlane.xlu0 %826
      %v828 = vsel %vm444, %v782, 0.0
      %829 = vadd.xlane.f32.xlu0 %v828
      %v830 = vpop.xlane.xlu0 %829
      %v831 = vmul.f32 %v785, %v448
      %v832 = vmul.f32 %v788, %v448
      %v833 = vmul.f32 %v791, %v448
      %v834 = vmul.f32 %v794, %v448
      %v835 = vmul.f32 %v797, %v448
      %v836 = vmul.f32 %v800, %v448
      %v837 = vmul.f32 %v803, %v448
      %v838 = vmul.f32 %v806, %v448
      %v839 = vmul.f32 %v809, %v448
      %v840 = vmul.f32 %v812, %v448
      %v841 = vmul.f32 %v815, %v448
      %v842 = vmul.f32 %v818, %v448
      %v843 = vmul.f32 %v821, %v448
      %v844 = vmul.f32 %v824, %v448
      %v845 = vmul.f32 %v827, %v448
      %v846 = vmul.f32 %v830, %v448
      %v847 = vadd.f32 %v831, 1e-05
      %v848 = vadd.f32 %v832, 1e-05
      %v849 = vadd.f32 %v833, 1e-05
      %v850 = vadd.f32 %v834, 1e-05
      %v851 = vadd.f32 %v835, 1e-05
      %v852 = vadd.f32 %v836, 1e-05
      %v853 = vadd.f32 %v837, 1e-05
      %v854 = vadd.f32 %v838, 1e-05
      %v855 = vadd.f32 %v839, 1e-05
      %v856 = vadd.f32 %v840, 1e-05
      %v857 = vadd.f32 %v841, 1e-05
      %v858 = vadd.f32 %v842, 1e-05
      %v859 = vadd.f32 %v843, 1e-05
      %v860 = vadd.f32 %v844, 1e-05
      %v861 = vadd.f32 %v845, 1e-05
      %v862 = vadd.f32 %v846, 1e-05
      %v863 = vrsqrt.pop %v847
      %v864 = vrsqrt.pop %v848
      %v865 = vrsqrt.pop %v849
      %v866 = vrsqrt.pop %v850
      %v867 = vrsqrt.pop %v851
      %v868 = vrsqrt.pop %v852
      %v869 = vrsqrt.pop %v853
      %v870 = vrsqrt.pop %v854
      %v871 = vrsqrt.pop %v855
      %v872 = vrsqrt.pop %v856
      %v873 = vrsqrt.pop %v857
      %v874 = vrsqrt.pop %v858
      %v875 = vrsqrt.pop %v859
      %v876 = vrsqrt.pop %v860
      %v877 = vrsqrt.pop %v861
      %v878 = vrsqrt.pop %v862
      %v879 = vmul.f32 %v751, %v863
      %v880 = vmul.f32 %v752, %v864
      %v881 = vmul.f32 %v753, %v865
      %v882 = vmul.f32 %v754, %v866
      %v883 = vmul.f32 %v755, %v867
      %v884 = vmul.f32 %v756, %v868
      %v885 = vmul.f32 %v757, %v869
      %v886 = vmul.f32 %v758, %v870
      %v887 = vmul.f32 %v759, %v871
      %v888 = vmul.f32 %v760, %v872
      %v889 = vmul.f32 %v761, %v873
      %v890 = vmul.f32 %v762, %v874
      %v891 = vmul.f32 %v763, %v875
      %v892 = vmul.f32 %v764, %v876
      %v893 = vmul.f32 %v765, %v877
      %v894 = vmul.f32 %v766, %v878
      %v896 = vlaneseq
      %v897 = vshrl.u32 %v896, 7
      %v898 = vsub.s32 0, %v897
      %v899 = vrot.slane %v685, %v898
      %v901 = vmul.f32 %v879, %v899
      %v902 = vmul.f32 %v880, %v899
      %v903 = vmul.f32 %v881, %v899
      %v904 = vmul.f32 %v882, %v899
      %v905 = vmul.f32 %v883, %v899
      %v906 = vmul.f32 %v884, %v899
      %v907 = vmul.f32 %v885, %v899
      %v908 = vmul.f32 %v886, %v899
      %v909 = vmul.f32 %v887, %v899
      %v910 = vmul.f32 %v888, %v899
      %v911 = vmul.f32 %v889, %v899
      %v912 = vmul.f32 %v890, %v899
      %v913 = vmul.f32 %v891, %v899
      %v914 = vmul.f32 %v892, %v899
      %v915 = vmul.f32 %v893, %v899
      %v916 = vmul.f32 %v894, %v899
      %v918 = vlaneseq
      %v919 = vshrl.u32 %v918, 7
      %v920 = vsub.s32 0, %v919
      %v921 = vrot.slane %v686, %v920
      %v923 = vadd.f32 %v901, %v921
      %v924 = vadd.f32 %v902, %v921
      %v925 = vadd.f32 %v903, %v921
      %v926 = vadd.f32 %v904, %v921
      %v927 = vadd.f32 %v905, %v921
      %v928 = vadd.f32 %v906, %v921
      %v929 = vadd.f32 %v907, %v921
      %v930 = vadd.f32 %v908, %v921
      %v931 = vadd.f32 %v909, %v921
      %v932 = vadd.f32 %v910, %v921
      %v933 = vadd.f32 %v911, %v921
      %v934 = vadd.f32 %v912, %v921
      %v935 = vadd.f32 %v913, %v921
      %v936 = vadd.f32 %v914, %v921
      %v937 = vadd.f32 %v915, %v921
      %v938 = vadd.f32 %v916, %v921
      %v939 = vld [vmem:[%s6] sm:$0xff]
      %v940 = vld [vmem:[%s6 + $0x8] sm:$0xff]
      %v941 = vld [vmem:[%s6 + $0x10] sm:$0xff]
      %v942 = vld [vmem:[%s6 + $0x18] sm:$0xff]
      %v943 = vld [vmem:[%s7] sm:$0x1]
      %v945 = vlaneseq
      %v946 = vshrl.u32 %v945, 7
      %v947 = vsub.s32 0, %v946
      %v948 = vrot.slane %v943, %v947
      %v951 = vsel %vm398, %v923, 0
      %v954 = vsel %vm398, %v924, 0
      %v957 = vsel %vm398, %v925, 0
      %v960 = vsel %vm398, %v926, 0
      %v963 = vsel %vm398, %v927, 0
      %v966 = vsel %vm398, %v928, 0
      %v969 = vsel %vm398, %v929, 0
      %v972 = vsel %vm398, %v930, 0
      %v975 = vsel %vm398, %v931, 0
      %v978 = vsel %vm398, %v932, 0
      %v981 = vsel %vm398, %v933, 0
      %v984 = vsel %vm398, %v934, 0
      %v987 = vsel %vm398, %v935, 0
      %v990 = vsel %vm398, %v936, 0
      %v993 = vsel %vm398, %v937, 0
      %v996 = vsel %vm398, %v938, 0
      %998 = vmatprep.subr.mxu0 0.0
      %999 = vmatpush1.msra.mxu0 %v939
      %1000 = vmatprep.subr.mxu0 0.0
      %1001 = vmatpush1.msra.mxu0 %v940
      %1002 = vmatprep.subr.mxu0 0.0
      %1003 = vmatpush1.msra.mxu0 %v941
      %1004 = vmatprep.subr.mxu0 0.0
      %1005 = vmatpush1.msra.mxu0 %v942
      %1006 = vmatprep.subr.mxu0 0.0
      %1007 = vmatpush1.msra.mxu0 0.0
      %1008 = vmatprep.subr.mxu0 0.0
      %1009 = vmatpush1.msra.mxu0 0.0
      %1010 = vmatprep.subr.mxu0 0.0
      %1011 = vmatpush1.msra.mxu0 0.0
      %1012 = vmatprep.subr.mxu0 0.0
      %1013 = vmatpush1.msra.mxu0 0.0
      %1014 = vmatprep.subr.mxu0 0.0
      %1015 = vmatpush1.msra.mxu0 0.0
      %1016 = vmatprep.subr.mxu0 0.0
      %1017 = vmatpush1.msra.mxu0 0.0
      %1018 = vmatprep.subr.mxu0 0.0
      %1019 = vmatpush1.msra.mxu0 0.0
      %1020 = vmatprep.subr.mxu0 0.0
      %1021 = vmatpush1.msra.mxu0 0.0
      %1022 = vmatprep.subr.mxu0 0.0
      %1023 = vmatpush1.msra.mxu0 0.0
      %1024 = vmatprep.subr.mxu0 0.0
      %1025 = vmatpush1.msra.mxu0 0.0
      %1026 = vmatprep.subr.mxu0 0.0
      %1027 = vmatpush1.msra.mxu0 0.0
      %1028 = vmatprep.subr.mxu0 0.0
      %1029 = vmatpush1.msra.mxu0 0.0
      %1030 = vmatprep.subr.mxu0 0.0
      %1031 = vmatpush1.msra.mxu0 0.0
      %1032 = vmatprep.subr.mxu0 0.0
      %1033 = vmatpush1.msra.mxu0 0.0
      %1034 = vmatprep.subr.mxu0 0.0
      %1035 = vmatpush1.msra.mxu0 0.0
      %1036 = vmatprep.subr.mxu0 0.0
      %1037 = vmatpush1.msra.mxu0 0.0
      %1038 = vmatprep.subr.mxu0 0.0
      %1039 = vmatpush1.msra.mxu0 0.0
      %1040 = vmatprep.subr.mxu0 0.0
      %1041 = vmatpush1.msra.mxu0 0.0
      %1042 = vmatprep.subr.mxu0 0.0
      %1043 = vmatpush1.msra.mxu0 0.0
      %1044 = vmatprep.subr.mxu0 0.0
      %1045 = vmatpush1.msra.mxu0 0.0
      %1046 = vmatprep.subr.mxu0 0.0
      %1047 = vmatpush1.msra.mxu0 0.0
      %1048 = vmatprep.subr.mxu0 0.0
      %1049 = vmatpush1.msra.mxu0 0.0
      %1050 = vmatprep.subr.mxu0 0.0
      %1051 = vmatpush1.msra.mxu0 0.0
      %1052 = vmatprep.subr.mxu0 0.0
      %1053 = vmatpush1.msra.mxu0 0.0
      %1054 = vmatprep.subr.mxu0 0.0
      %1055 = vmatpush1.msra.mxu0 0.0
      %1056 = vmatprep.subr.mxu0 0.0
      %1057 = vmatpush1.msra.mxu0 0.0
      %1058 = vmatprep.subr.mxu0 0.0
      %1059 = vmatpush1.msra.mxu0 0.0
      %1060 = vmatprep.subr.mxu0 0.0
      %1061 = vmatpush1.msra.mxu0 0.0
      %1062 = vmatprep.mubr.f32.mxu0 0.0
      %1063 = vmatmul.mubr.f32.gmra.mrb[0].mxu0 %v951
      %v1064 = vpop.f32.mrb[0].mxu0
      %v1065 = vadd.f32 %v948, %v1064
      %v1066 = vpop.f32.mrb[0].mxu0
      %1067 = vmatprep.mubr.f32.mxu0 0.0
      %1068 = vmatmul.mubr.f32.gmra.mrb[0].mxu0 %v954
      %v1069 = vpop.f32.mrb[0].mxu0
      %v1070 = vadd.f32 %v948, %v1069
      %v1071 = vpop.f32.mrb[0].mxu0
      %1072 = vmatprep.mubr.f32.mxu0 0.0
      %1073 = vmatmul.mubr.f32.gmra.mrb[0].mxu0 %v957
      %v1074 = vpop.f32.mrb[0].mxu0
      %v1075 = vadd.f32 %v948, %v1074
      %v1076 = vpop.f32.mrb[0].mxu0
      %1077 = vmatprep.mubr.f32.mxu0 0.0
      %1078 = vmatmul.mubr.f32.gmra.mrb[0].mxu0 %v960
      %v1079 = vpop.f32.mrb[0].mxu0
      %v1080 = vadd.f32 %v948, %v1079
      %v1081 = vpop.f32.mrb[0].mxu0
      %1082 = vmatprep.mubr.f32.mxu0 0.0
      %1083 = vmatmul.mubr.f32.gmra.mrb[0].mxu0 %v963
      %v1084 = vpop.f32.mrb[0].mxu0
      %v1085 = vadd.f32 %v948, %v1084
      %v1086 = vpop.f32.mrb[0].mxu0
      %1087 = vmatprep.mubr.f32.mxu0 0.0
      %1088 = vmatmul.mubr.f32.gmra.mrb[0].mxu0 %v966
      %v1089 = vpop.f32.mrb[0].mxu0
      %v1090 = vadd.f32 %v948, %v1089
      %v1091 = vpop.f32.mrb[0].mxu0
      %1092 = vmatprep.mubr.f32.mxu0 0.0
      %1093 = vmatmul.mubr.f32.gmra.mrb[0].mxu0 %v969
      %v1094 = vpop.f32.mrb[0].mxu0
      %v1095 = vadd.f32 %v948, %v1094
      %v1096 = vpop.f32.mrb[0].mxu0
      %1097 = vmatprep.mubr.f32.mxu0 0.0
      %1098 = vmatmul.mubr.f32.gmra.mrb[0].mxu0 %v972
      %v1099 = vpop.f32.mrb[0].mxu0
      %v1100 = vadd.f32 %v948, %v1099
      %v1101 = vpop.f32.mrb[0].mxu0
      %1102 = vmatprep.mubr.f32.mxu0 0.0
      %1103 = vmatmul.mubr.f32.gmra.mrb[0].mxu0 %v975
      %v1104 = vpop.f32.mrb[0].mxu0
      %v1105 = vadd.f32 %v948, %v1104
      %v1106 = vpop.f32.mrb[0].mxu0
      %1107 = vmatprep.mubr.f32.mxu0 0.0
      %1108 = vmatmul.mubr.f32.gmra.mrb[0].mxu0 %v978
      %v1109 = vpop.f32.mrb[0].mxu0
      %v1110 = vadd.f32 %v948, %v1109
      %v1111 = vpop.f32.mrb[0].mxu0
      %1112 = vmatprep.mubr.f32.mxu0 0.0
      %1113 = vmatmul.mubr.f32.gmra.mrb[0].mxu0 %v981
      %v1114 = vpop.f32.mrb[0].mxu0
      %v1115 = vadd.f32 %v948, %v1114
      %v1116 = vpop.f32.mrb[0].mxu0
      %1117 = vmatprep.mubr.f32.mxu0 0.0
      %1118 = vmatmul.mubr.f32.gmra.mrb[0].mxu0 %v984
      %v1119 = vpop.f32.mrb[0].mxu0
      %v1120 = vadd.f32 %v948, %v1119
      %v1121 = vpop.f32.mrb[0].mxu0
      %1122 = vmatprep.mubr.f32.mxu0 0.0
      %1123 = vmatmul.mubr.f32.gmra.mrb[0].mxu0 %v987
      %v1124 = vpop.f32.mrb[0].mxu0
      %v1125 = vadd.f32 %v948, %v1124
      %v1126 = vpop.f32.mrb[0].mxu0
      %1127 = vmatprep.mubr.f32.mxu0 0.0
      %1128 = vmatmul.mubr.f32.gmra.mrb[0].mxu0 %v990
      %v1129 = vpop.f32.mrb[0].mxu0
      %v1130 = vadd.f32 %v948, %v1129
      %v1131 = vpop.f32.mrb[0].mxu0
      %1132 = vmatprep.mubr.f32.mxu0 0.0
      %1133 = vmatmul.mubr.f32.gmra.mrb[0].mxu0 %v993
      %v1134 = vpop.f32.mrb[0].mxu0
      %v1135 = vadd.f32 %v948, %v1134
      %v1136 = vpop.f32.mrb[0].mxu0
      %1137 = vmatprep.mubr.f32.mxu0 0.0
      %1138 = vmatmul.mubr.f32.gmra.mrb[0].mxu0 %v996
      %v1139 = vpop.f32.mrb[0].mxu0
      %v1140 = vadd.f32 %v948, %v1139
      %v1141 = vpop.f32.mrb[0].mxu0
      %1142 = vdwg.mxu0
      %v1143 = vmul.f32 %v1065, 0.5
      %v1144 = vmul.f32 %v1070, 0.5
      %v1145 = vmul.f32 %v1075, 0.5
      %v1146 = vmul.f32 %v1080, 0.5
      %v1147 = vmul.f32 %v1085, 0.5
      %v1148 = vmul.f32 %v1090, 0.5
      %v1149 = vmul.f32 %v1095, 0.5
      %v1150 = vmul.f32 %v1100, 0.5
      %v1151 = vmul.f32 %v1105, 0.5
      %v1152 = vmul.f32 %v1110, 0.5
      %v1153 = vmul.f32 %v1115, 0.5
      %v1154 = vmul.f32 %v1120, 0.5
      %v1155 = vmul.f32 %v1125, 0.5
      %v1156 = vmul.f32 %v1130, 0.5
      %v1157 = vmul.f32 %v1135, 0.5
      %v1158 = vmul.f32 %v1140, 0.5
      %v1159 = vmul.f32 %v1065, 0.044715
      %v1160 = vmul.f32 %v1070, 0.044715
      %v1161 = vmul.f32 %v1075, 0.044715
      %v1162 = vmul.f32 %v1080, 0.044715
      %v1163 = vmul.f32 %v1085, 0.044715
      %v1164 = vmul.f32 %v1090, 0.044715
      %v1165 = vmul.f32 %v1095, 0.044715
      %v1166 = vmul.f32 %v1100, 0.044715
      %v1167 = vmul.f32 %v1105, 0.044715
      %v1168 = vmul.f32 %v1110, 0.044715
      %v1169 = vmul.f32 %v1115, 0.044715
      %v1170 = vmul.f32 %v1120, 0.044715
      %v1171 = vmul.f32 %v1125, 0.044715
      %v1172 = vmul.f32 %v1130, 0.044715
      %v1173 = vmul.f32 %v1135, 0.044715
      %v1174 = vmul.f32 %v1140, 0.044715
      %v1175 = vmul.f32 %v1159, %v1065
      %v1176 = vmul.f32 %v1160, %v1070
      %v1177 = vmul.f32 %v1161, %v1075
      %v1178 = vmul.f32 %v1162, %v1080
      %v1179 = vmul.f32 %v1163, %v1085
      %v1180 = vmul.f32 %v1164, %v1090
      %v1181 = vmul.f32 %v1165, %v1095
      %v1182 = vmul.f32 %v1166, %v1100
      %v1183 = vmul.f32 %v1167, %v1105
      %v1184 = vmul.f32 %v1168, %v1110
      %v1185 = vmul.f32 %v1169, %v1115
      %v1186 = vmul.f32 %v1170, %v1120
      %v1187 = vmul.f32 %v1171, %v1125
      %v1188 = vmul.f32 %v1172, %v1130
      %v1189 = vmul.f32 %v1173, %v1135
      %v1190 = vmul.f32 %v1174, %v1140
      %v1191 = vmul.f32 %v1175, %v1065
      %v1192 = vmul.f32 %v1176, %v1070
      %v1193 = vmul.f32 %v1177, %v1075
      %v1194 = vmul.f32 %v1178, %v1080
      %v1195 = vmul.f32 %v1179, %v1085
      %v1196 = vmul.f32 %v1180, %v1090
      %v1197 = vmul.f32 %v1181, %v1095
      %v1198 = vmul.f32 %v1182, %v1100
      %v1199 = vmul.f32 %v1183, %v1105
      %v1200 = vmul.f32 %v1184, %v1110
      %v1201 = vmul.f32 %v1185, %v1115
      %v1202 = vmul.f32 %v1186, %v1120
      %v1203 = vmul.f32 %v1187, %v1125
      %v1204 = vmul.f32 %v1188, %v1130
      %v1205 = vmul.f32 %v1189, %v1135
      %v1206 = vmul.f32 %v1190, %v1140
      %v1207 = vadd.f32 %v1065, %v1191
      %v1208 = vadd.f32 %v1070, %v1192
      %v1209 = vadd.f32 %v1075, %v1193
      %v1210 = vadd.f32 %v1080, %v1194
      %v1211 = vadd.f32 %v1085, %v1195
      %v1212 = vadd.f32 %v1090, %v1196
      %v1213 = vadd.f32 %v1095, %v1197
      %v1214 = vadd.f32 %v1100, %v1198
      %v1215 = vadd.f32 %v1105, %v1199
      %v1216 = vadd.f32 %v1110, %v1200
      %v1217 = vadd.f32 %v1115, %v1201
      %v1218 = vadd.f32 %v1120, %v1202
      %v1219 = vadd.f32 %v1125, %v1203
      %v1220 = vadd.f32 %v1130, %v1204
      %v1221 = vadd.f32 %v1135, %v1205
      %v1222 = vadd.f32 %v1140, %v1206
      %v1223 = vmul.f32 %v1207, 0.7978846
      %v1224 = vmul.f32 %v1208, 0.7978846
      %v1225 = vmul.f32 %v1209, 0.7978846
      %v1226 = vmul.f32 %v1210, 0.7978846
      %v1227 = vmul.f32 %v1211, 0.7978846
      %v1228 = vmul.f32 %v1212, 0.7978846
      %v1229 = vmul.f32 %v1213, 0.7978846
      %v1230 = vmul.f32 %v1214, 0.7978846
      %v1231 = vmul.f32 %v1215, 0.7978846
      %v1232 = vmul.f32 %v1216, 0.7978846
      %v1233 = vmul.f32 %v1217, 0.7978846
      %v1234 = vmul.f32 %v1218, 0.7978846
      %v1235 = vmul.f32 %v1219, 0.7978846
      %v1236 = vmul.f32 %v1220, 0.7978846
      %v1237 = vmul.f32 %v1221, 0.7978846
      %v1238 = vmul.f32 %v1222, 0.7978846
      %v1239 = vtanh.pop %v1223
      %v1240 = vtanh.pop %v1224
      %v1241 = vtanh.pop %v1225
      %v1242 = vtanh.pop %v1226
      %v1243 = vtanh.pop %v1227
      %v1244 = vtanh.pop %v1228
      %v1245 = vtanh.pop %v1229
      %v1246 = vtanh.pop %v1230
      %v1247 = vtanh.pop %v1231
      %v1248 = vtanh.pop %v1232
      %v1249 = vtanh.pop %v1233
      %v1250 = vtanh.pop %v1234
      %v1251 = vtanh.pop %v1235
      %v1252 = vtanh.pop %v1236
      %v1253 = vtanh.pop %v1237
      %v1254 = vtanh.pop %v1238
      %v1255 = vadd.f32 %v1239, 1.0
      %v1256 = vadd.f32 %v1240, 1.0
      %v1257 = vadd.f32 %v1241, 1.0
      %v1258 = vadd.f32 %v1242, 1.0
      %v1259 = vadd.f32 %v1243, 1.0
      %v1260 = vadd.f32 %v1244, 1.0
      %v1261 = vadd.f32 %v1245, 1.0
      %v1262 = vadd.f32 %v1246, 1.0
      %v1263 = vadd.f32 %v1247, 1.0
      %v1264 = vadd.f32 %v1248, 1.0
      %v1265 = vadd.f32 %v1249, 1.0
      %v1266 = vadd.f32 %v1250, 1.0
      %v1267 = vadd.f32 %v1251, 1.0
      %v1268 = vadd.f32 %v1252, 1.0
      %v1269 = vadd.f32 %v1253, 1.0
      %v1270 = vadd.f32 %v1254, 1.0
      %v1271 = vmul.f32 %v1143, %v1255
      %v1272 = vmul.f32 %v1144, %v1256
      %v1273 = vmul.f32 %v1145, %v1257
      %v1274 = vmul.f32 %v1146, %v1258
      %v1275 = vmul.f32 %v1147, %v1259
      %v1276 = vmul.f32 %v1148, %v1260
      %v1277 = vmul.f32 %v1149, %v1261
      %v1278 = vmul.f32 %v1150, %v1262
      %v1279 = vmul.f32 %v1151, %v1263
      %v1280 = vmul.f32 %v1152, %v1264
      %v1281 = vmul.f32 %v1153, %v1265
      %v1282 = vmul.f32 %v1154, %v1266
      %v1283 = vmul.f32 %v1155, %v1267
      %v1284 = vmul.f32 %v1156, %v1268
      %v1285 = vmul.f32 %v1157, %v1269
      %v1286 = vmul.f32 %v1158, %v1270
      %v1287 = vld [vmem:[%s8] sm:$0xff]
      %v1288 = vld [vmem:[%s8 + $0x8] sm:$0xff]
      %v1289 = vld [vmem:[%s8 + $0x10] sm:$0xff]
      %v1290 = vld [vmem:[%s8 + $0x18] sm:$0xff]
      %v1291 = vld [vmem:[%s8 + $0x20] sm:$0xff]
      %v1292 = vld [vmem:[%s8 + $0x28] sm:$0xff]
      %v1293 = vld [vmem:[%s8 + $0x30] sm:$0xff]
      %v1294 = vld [vmem:[%s8 + $0x38] sm:$0xff]
      %v1295 = vld [vmem:[%s8 + $0x40] sm:$0xff]
      %v1296 = vld [vmem:[%s8 + $0x48] sm:$0xff]
      %v1297 = vld [vmem:[%s8 + $0x50] sm:$0xff]
      %v1298 = vld [vmem:[%s8 + $0x58] sm:$0xff]
      %v1299 = vld [vmem:[%s8 + $0x60] sm:$0xff]
      %v1300 = vld [vmem:[%s8 + $0x68] sm:$0xff]
      %v1301 = vld [vmem:[%s8 + $0x70] sm:$0xff]
      %v1302 = vld [vmem:[%s8 + $0x78] sm:$0xff]
      %v1303 = vld [vmem:[%s9] sm:$0x1]
      %v1305 = vlaneseq
      %v1306 = vshrl.u32 %v1305, 7
      %v1307 = vsub.s32 0, %v1306
      %v1308 = vrot.slane %v1303, %v1307
      %1310 = vmatprep.subr.mxu0 0.0
      %1311 = vmatpush1.msra.mxu0 %v1287
      %1312 = vmatprep.subr.mxu0 0.0
      %1313 = vmatpush1.msra.mxu0 %v1288
      %1314 = vmatprep.subr.mxu0 0.0
      %1315 = vmatpush1.msra.mxu0 %v1289
      %1316 = vmatprep.subr.mxu0 0.0
      %1317 = vmatpush1.msra.mxu0 %v1290
      %1318 = vmatprep.subr.mxu0 0.0
      %1319 = vmatpush1.msra.mxu0 %v1291
      %1320 = vmatprep.subr.mxu0 0.0
      %1321 = vmatpush1.msra.mxu0 %v1292
      %1322 = vmatprep.subr.mxu0 0.0
      %1323 = vmatpush1.msra.mxu0 %v1293
      %1324 = vmatprep.subr.mxu0 0.0
      %1325 = vmatpush1.msra.mxu0 %v1294
      %1326 = vmatprep.subr.mxu0 0.0
      %1327 = vmatpush1.msra.mxu0 %v1295
      %1328 = vmatprep.subr.mxu0 0.0
      %1329 = vmatpush1.msra.mxu0 %v1296
      %1330 = vmatprep.subr.mxu0 0.0
      %1331 = vmatpush1.msra.mxu0 %v1297
      %1332 = vmatprep.subr.mxu0 0.0
      %1333 = vmatpush1.msra.mxu0 %v1298
      %1334 = vmatprep.subr.mxu0 0.0
      %1335 = vmatpush1.msra.mxu0 %v1299
      %1336 = vmatprep.subr.mxu0 0.0
      %1337 = vmatpush1.msra.mxu0 %v1300
      %1338 = vmatprep.subr.mxu0 0.0
      %1339 = vmatpush1.msra.mxu0 %v1301
      %1340 = vmatprep.subr.mxu0 0.0
      %1341 = vmatpush1.msra.mxu0 %v1302
      %1342 = vmatprep.subr.mxu0 0.0
      %1343 = vmatpush1.msra.mxu0 0.0
      %1344 = vmatprep.subr.mxu0 0.0
      %1345 = vmatpush1.msra.mxu0 0.0
      %1346 = vmatprep.subr.mxu0 0.0
      %1347 = vmatpush1.msra.mxu0 0.0
      %1348 = vmatprep.subr.mxu0 0.0
      %1349 = vmatpush1.msra.mxu0 0.0
      %1350 = vmatprep.subr.mxu0 0.0
      %1351 = vmatpush1.msra.mxu0 0.0
      %1352 = vmatprep.subr.mxu0 0.0
      %1353 = vmatpush1.msra.mxu0 0.0
      %1354 = vmatprep.subr.mxu0 0.0
      %1355 = vmatpush1.msra.mxu0 0.0
      %1356 = vmatprep.subr.mxu0 0.0
      %1357 = vmatpush1.msra.mxu0 0.0
      %1358 = vmatprep.subr.mxu0 0.0
      %1359 = vmatpush1.msra.mxu0 0.0
      %1360 = vmatprep.subr.mxu0 0.0
      %1361 = vmatpush1.msra.mxu0 0.0
      %1362 = vmatprep.subr.mxu0 0.0
      %1363 = vmatpush1.msra.mxu0 0.0
      %1364 = vmatprep.subr.mxu0 0.0
      %1365 = vmatpush1.msra.mxu0 0.0
      %1366 = vmatprep.subr.mxu0 0.0
      %1367 = vmatpush1.msra.mxu0 0.0
      %1368 = vmatprep.subr.mxu0 0.0
      %1369 = vmatpush1.msra.mxu0 0.0
      %1370 = vmatprep.subr.mxu0 0.0
      %1371 = vmatpush1.msra.mxu0 0.0
      %1372 = vmatprep.subr.mxu0 0.0
      %1373 = vmatpush1.msra.mxu0 0.0
      %1374 = vmatprep.mubr.f32.mxu0 0.0
      %1375 = vmatmul.mubr.f32.gmra.mrb[0].mxu0 %v1271
      %v1376 = vpop.f32.mrb[0].mxu0
      %v1377 = vadd.f32 %v1308, %v1376
      %v1378 = vpop.f32.mrb[0].mxu0
      %1379 = vmatprep.mubr.f32.mxu0 0.0
      %1380 = vmatmul.mubr.f32.gmra.mrb[0].mxu0 %v1272
      %v1381 = vpop.f32.mrb[0].mxu0
      %v1382 = vadd.f32 %v1308, %v1381
      %v1383 = vpop.f32.mrb[0].mxu0
      %1384 = vmatprep.mubr.f32.mxu0 0.0
      %1385 = vmatmul.mubr.f32.gmra.mrb[0].mxu0 %v1273
      %v1386 = vpop.f32.mrb[0].mxu0
      %v1387 = vadd.f32 %v1308, %v1386
      %v1388 = vpop.f32.mrb[0].mxu0
      %1389 = vmatprep.mubr.f32.mxu0 0.0
      %1390 = vmatmul.mubr.f32.gmra.mrb[0].mxu0 %v1274
      %v1391 = vpop.f32.mrb[0].mxu0
      %v1392 = vadd.f32 %v1308, %v1391
      %v1393 = vpop.f32.mrb[0].mxu0
      %1394 = vmatprep.mubr.f32.mxu0 0.0
      %1395 = vmatmul.mubr.f32.gmra.mrb[0].mxu0 %v1275
      %v1396 = vpop.f32.mrb[0].mxu0
      %v1397 = vadd.f32 %v1308, %v1396
      %v1398 = vpop.f32.mrb[0].mxu0
      %1399 = vmatprep.mubr.f32.mxu0 0.0
      %1400 = vmatmul.mubr.f32.gmra.mrb[0].mxu0 %v1276
      %v1401 = vpop.f32.mrb[0].mxu0
      %v1402 = vadd.f32 %v1308, %v1401
      %v1403 = vpop.f32.mrb[0].mxu0
      %1404 = vmatprep.mubr.f32.mxu0 0.0
      %1405 = vmatmul.mubr.f32.gmra.mrb[0].mxu0 %v1277
      %v1406 = vpop.f32.mrb[0].mxu0
      %v1407 = vadd.f32 %v1308, %v1406
      %v1408 = vpop.f32.mrb[0].mxu0
      %1409 = vmatprep.mubr.f32.mxu0 0.0
      %1410 = vmatmul.mubr.f32.gmra.mrb[0].mxu0 %v1278
      %v1411 = vpop.f32.mrb[0].mxu0
      %v1412 = vadd.f32 %v1308, %v1411
      %v1413 = vpop.f32.mrb[0].mxu0
      %1414 = vmatprep.mubr.f32.mxu0 0.0
      %1415 = vmatmul.mubr.f32.gmra.mrb[0].mxu0 %v1279
      %v1416 = vpop.f32.mrb[0].mxu0
      %v1417 = vadd.f32 %v1308, %v1416
      %v1418 = vpop.f32.mrb[0].mxu0
      %1419 = vmatprep.mubr.f32.mxu0 0.0
      %1420 = vmatmul.mubr.f32.gmra.mrb[0].mxu0 %v1280
      %v1421 = vpop.f32.mrb[0].mxu0
      %v1422 = vadd.f32 %v1308, %v1421
      %v1423 = vpop.f32.mrb[0].mxu0
      %1424 = vmatprep.mubr.f32.mxu0 0.0
      %1425 = vmatmul.mubr.f32.gmra.mrb[0].mxu0 %v1281
      %v1426 = vpop.f32.mrb[0].mxu0
      %v1427 = vadd.f32 %v1308, %v1426
      %v1428 = vpop.f32.mrb[0].mxu0
      %1429 = vmatprep.mubr.f32.mxu0 0.0
      %1430 = vmatmul.mubr.f32.gmra.mrb[0].mxu0 %v1282
      %v1431 = vpop.f32.mrb[0].mxu0
      %v1432 = vadd.f32 %v1308, %v1431
      %v1433 = vpop.f32.mrb[0].mxu0
      %1434 = vmatprep.mubr.f32.mxu0 0.0
      %1435 = vmatmul.mubr.f32.gmra.mrb[0].mxu0 %v1283
      %v1436 = vpop.f32.mrb[0].mxu0
      %v1437 = vadd.f32 %v1308, %v1436
      %v1438 = vpop.f32.mrb[0].mxu0
      %1439 = vmatprep.mubr.f32.mxu0 0.0
      %1440 = vmatmul.mubr.f32.gmra.mrb[0].mxu0 %v1284
      %v1441 = vpop.f32.mrb[0].mxu0
      %v1442 = vadd.f32 %v1308, %v1441
      %v1443 = vpop.f32.mrb[0].mxu0
      %1444 = vmatprep.mubr.f32.mxu0 0.0
      %1445 = vmatmul.mubr.f32.gmra.mrb[0].mxu0 %v1285
      %v1446 = vpop.f32.mrb[0].mxu0
      %v1447 = vadd.f32 %v1308, %v1446
      %v1448 = vpop.f32.mrb[0].mxu0
      %1449 = vmatprep.mubr.f32.mxu0 0.0
      %1450 = vmatmul.mubr.f32.gmra.mrb[0].mxu0 %v1286
      %v1451 = vpop.f32.mrb[0].mxu0
      %v1452 = vadd.f32 %v1308, %v1451
      %v1453 = vpop.f32.mrb[0].mxu0
      %1454 = vdwg.mxu0
      %v1455 = vadd.f32 %v669, %v1377
      %v1456 = vadd.f32 %v670, %v1382
      %v1457 = vadd.f32 %v671, %v1387
      %v1458 = vadd.f32 %v672, %v1392
      %v1459 = vadd.f32 %v673, %v1397
      %v1460 = vadd.f32 %v674, %v1402
      %v1461 = vadd.f32 %v675, %v1407
      %v1462 = vadd.f32 %v676, %v1412
      %v1463 = vadd.f32 %v677, %v1417
      %v1464 = vadd.f32 %v678, %v1422
      %v1465 = vadd.f32 %v679, %v1427
      %v1466 = vadd.f32 %v680, %v1432
      %v1467 = vadd.f32 %v681, %v1437
      %v1468 = vadd.f32 %v682, %v1442
      %v1469 = vadd.f32 %v683, %v1447
      %v1470 = vadd.f32 %v684, %v1452
      %1471 = vst.msk [vmem:[%s379] sm:$0xff] %vm398, %v1455
      %1472 = vst.msk [vmem:[%s379 + $0x8] sm:$0xff] %vm398, %v1456
      %1473 = vst.msk [vmem:[%s379 + $0x10] sm:$0xff] %vm398, %v1457
      %1474 = vst.msk [vmem:[%s379 + $0x18] sm:$0xff] %vm398, %v1458
      %1475 = vst.msk [vmem:[%s379 + $0x20] sm:$0xff] %vm398, %v1459
      %1476 = vst.msk [vmem:[%s379 + $0x28] sm:$0xff] %vm398, %v1460
      %1477 = vst.msk [vmem:[%s379 + $0x30] sm:$0xff] %vm398, %v1461
      %1478 = vst.msk [vmem:[%s379 + $0x38] sm:$0xff] %vm398, %v1462
      %1479 = vst.msk [vmem:[%s379 + $0x40] sm:$0xff] %vm398, %v1463
      %1480 = vst.msk [vmem:[%s379 + $0x48] sm:$0xff] %vm398, %v1464
      %1481 = vst.msk [vmem:[%s379 + $0x50] sm:$0xff] %vm398, %v1465
      %1482 = vst.msk [vmem:[%s379 + $0x58] sm:$0xff] %vm398, %v1466
      %1483 = vst.msk [vmem:[%s379 + $0x60] sm:$0xff] %vm398, %v1467
      %1484 = vst.msk [vmem:[%s379 + $0x68] sm:$0xff] %vm398, %v1468
      %1485 = vst.msk [vmem:[%s379 + $0x70] sm:$0xff] %vm398, %v1469
      %1486 = vst.msk [vmem:[%s379 + $0x78] sm:$0x1] %vm444, %v1470
      %p1487 = scmp.lt.s32.totalorder %s21, 1
      %s1488 = scalar_select %p1487, %s21, 1
      %s1489 = smul.addr %s1488, 16
      %s1490 = smul.addr %s1489, 8
      %s1491 = scalar_lea.vmem %s10, %s1490
      // Predicated region
      $region61: #{_forward_impl.3} parent=59 // pred_check
        %p1492 = pneg %p259
      $region62: #{_forward_impl.3} parent=59 // pred_check_branch
        %1494 = sbr.rel (%p1492) target = $region64
      $region63: #{_forward_impl.3} parent=59 // pred_region
        _
      $region64: #{_forward_impl.3} parent=59 // pred_fallthru
        _
    $region60: #{_forward_impl.3} parent=5 // pred_fallthru
      _
    %p1495 = scmp.le.s32.totalorder 2, %s16
    // Predicated region
    $region65: #{_forward_impl.3} parent=5 // pred_check
      %p1496 = pneg %p1495
    $region66: #{_forward_impl.3} parent=5 // pred_check_branch
      %1498 = sbr.rel (%p1496) target = $region68
    $region67: #{_forward_impl.3} parent=5 // pred_region
      %s1499 = ssub.s32 %s16, 2
      // Predicated region
      $region69: #{_forward_impl.3} parent=67 // pred_check
        %p1500 = pneg %p265
      $region70: #{_forward_impl.3} parent=67 // pred_check_branch
        %1502 = sbr.rel (%p1500) target = $region72
      $region71: #{_forward_impl.3} parent=67 // pred_region
        %p1503 = scmp.lt.s32.totalorder %s22, 1
        %s1504 = scalar_select %p1503, %s22, 1
        %s1505 = smul.addr %s1504, 16
        %s1506 = smul.addr %s1505, 8
        %s1507 = scalar_lea.vmem %s10, %s1506
      $region72: #{_forward_impl.3} parent=67 // pred_fallthru
        _
    $region68: #{_forward_impl.3} parent=5 // pred_fallthru
      _
  $region6: #{_forward_impl.3} parent=0 // loop_footer
    %s20 = sadd.s32 1, %s16
  $region7: #{_forward_impl.3} parent=0 // loop_footer_branch
    %15 = sbr.rel target = $region3
  $region8: #{_forward_impl.3} parent=0 // loop_exit
    _

</llo_original>
